<compile_context>
chip_gen: v6e
topology: v6e:2x2x1
jax: 0.10.0
libtpu: 0.0.40
codegen_flags: <defaults>
</compile_context>

<pallas_src>
import functools

import numpy as np
import jax
import jax.numpy as jnp
from jax import lax
from jax.experimental import pallas as pl
from jax.experimental.pallas import tpu as pltpu

_LANE = 128          # gather chunk width = one vreg of lanes
_LANE_SHIFT = 7      # log2(_LANE)
_MAX_RESIDENT_CHUNKS = 16   # resident-chunk gather only for tiny ID volumes

# corner index c = 4*cz + 2*cy + cx (used by the pure-JAX reference)
_CORNERS = [(cz, cy, cx) for cz in (0, 1) for cy in (0, 1) for cx in (0, 1)]


def _round_up(x, m):
    return ((x + m - 1) // m) * m


def _weight_volume_kernel(pts_ref, bbox_ref, table_ref, ids_ref, w_ref,
                          *, Nx, Ny, Nz):
    TP = pts_ref.shape[1]              # points per tile (on lanes)
    G_pad = table_ref.shape[1]
    n_chunks = G_pad // _LANE
    n_pblocks = TP // _LANE

    # ---- hoisted, tile-size-independent values -------------------------------
    bbox = bbox_ref[...]               # [3, 2]
    bmin = bbox[:, 0:1]                # [3, 1]
    ext = bbox[:, 1:2] - bmin          # [3, 1]

    # 8 corners on sublanes, c = 4*cz + 2*cy + cx
    c = lax.broadcasted_iota(jnp.int32, (8, 1), 0)
    cx = c & 1
    cy = (c >> 1) & 1
    cz = (c >> 2) & 1
    corner_off = cz * (Ny * Nx) + cy * Nx + cx        # [8, 1] int32
    mx, my, mz = (cx == 1), (cy == 1), (cz == 1)      # [8, 1] bool

    # ID table chunks: table is already broadcast to 8 sublanes by the wrapper,
    # so each chunk is a single static-slice vreg load (no per-step XLU bcast).
    chunks = [table_ref[:, k * _LANE:(k + 1) * _LANE] for k in range(n_chunks)]

    # ---- per-128-point block loop: O(1) live vregs w.r.t. tile size ----------
    for j in range(n_pblocks):
        sl = slice(j * _LANE, (j + 1) * _LANE)
        p = pts_ref[:, sl]             # [3, 128] f32, xyz on sublanes

        # forward(): normalize to [0, 1] then to [-1, 1]
        # (original op chain kept so voxel indices match the reference exactly)
        norm = (p - bmin) / ext
        norm = norm * 2.0 - 1.0        # [3, 128]

        def axis_coords(row, n):
            gr = (norm[row:row + 1, :] + 1.0) * 0.5 * (n - 1)   # [1, 128]
            gr = jnp.clip(gr, 0.0, float(n - 1))
            i0 = jnp.floor(gr).astype(jnp.int32)
            i0 = jnp.minimum(i0, n - 2)                         # keep i0+1 in range
            return i0, gr - i0.astype(jnp.float32)

        ix0, tx = axis_coords(0, Nx)
        iy0, ty = axis_coords(1, Ny)
        iz0, tz = axis_coords(2, Nz)

        # Trilinear weights for all 8 corners at once; dense [8, 128] store.
        wx = jnp.where(mx, tx, 1.0 - tx)
        wy = jnp.where(my, ty, 1.0 - ty)
        wz = jnp.where(mz, tz, 1.0 - tz)
        w_ref[:, sl] = wz * wy * wx

        # Flat index of each corner; split into (chunk, lane) with shift/and
        # (lin >= 0 always, so no signed div/mod correction needed).
        lin = (iz0 * (Ny * Nx) + iy0 * Nx + ix0) + corner_off   # [8, 128]
        hi = lin >> _LANE_SHIFT
        lo = lin & (_LANE - 1)

        # Vector gather: dynamic in-chunk gather + select by chunk id.
        acc = jnp.take_along_axis(chunks[0], lo, axis=1,
                                  mode="promise_in_bounds")
        for k in range(1, n_chunks):
            cand = jnp.take_along_axis(chunks[k], lo, axis=1,
                                       mode="promise_in_bounds")
            acc = jnp.where(hi == k, cand, acc)
        ids_ref[:, sl] = acc            # dense [8, 128] store


def weight_volume_index_forward(points, grid_id, bbox_min, bbox_max, *,
                                tile=2048, corner_major=False):
    """points: [P, 3] f32; grid_id: [Nz, Ny, Nx] int32; bbox_*: [3] f32.

    Returns (ids, weights) as [P, 8] (default), or [8, P] lane-dense slabs if
    corner_major=True (skips the XLA output transpose for large P).
    """
    P = points.shape[0]
    Nz, Ny, Nx = grid_id.shape
    assert Nx >= 2 and Ny >= 2 and Nz >= 2, "each grid axis needs >= 2 samples"
    G = Nx * Ny * Nz
    G_pad = _round_up(G, _LANE)
    n_chunks = G_pad // _LANE
    # TODO(synk): for larger ID volumes, switch to HBM (memory_space=pl.ANY)
    # + DMA gather (per-z-slab) instead of the resident-chunk select loop.
    assert n_chunks <= _MAX_RESIDENT_CHUNKS, (
        "resident-chunk gather path is only intended for tiny ID volumes "
        f"(G <= {_MAX_RESIDENT_CHUNKS * _LANE}); got G={G}")

    # Point tile: multiple of 128, as large as possible (per-grid-step overhead
    # dominates).  Only cap it for load-balance when the device actually has
    # more than one TensorCore (v7x megacore); on single-TC chips extra steps
    # are pure overhead.
    tile = max(_LANE, (tile // _LANE) * _LANE)
    tile = min(tile, _round_up(max(P, 1), _LANE))        # never exceed the work
    num_tc = getattr(jax.devices()[0], "num_cores", 1) or 1
    if num_tc > 1:
        per_core = (max(P, 1) + num_tc - 1) // num_tc
        tile = max(_LANE, min(tile, _round_up(per_core, _LANE)))
    P_pad = _round_up(max(P, 1), tile)

    pts_t = jnp.pad(points.astype(jnp.float32).T,
                    ((0, 0), (0, P_pad - P)))                         # [3, P_pad]
    bbox_t = jnp.stack([bbox_min.astype(jnp.float32),
                        bbox_max.astype(jnp.float32)], axis=1)        # [3, 2]
    grid_flat = jnp.pad(grid_id.reshape(1, G).astype(jnp.int32),
                        ((0, 0), (0, G_pad - G)))                     # [1, G_pad]
    table = jnp.broadcast_to(grid_flat, (8, G_pad))    # pre-broadcast once (16 KiB @ 8^3)

    kernel = functools.partial(_weight_volume_kernel, Nx=Nx, Ny=Ny, Nz=Nz)

    ids_t, w_t = pl.pallas_call(
        kernel,
        out_shape=(jax.ShapeDtypeStruct((8, P_pad), jnp.int32),
                   jax.ShapeDtypeStruct((8, P_pad), jnp.float32)),
        grid_spec=pltpu.PrefetchScalarGridSpec(
            num_scalar_prefetch=0,
            grid=(P_pad // tile,),
            in_specs=[
                pl.BlockSpec((3, tile), lambda i: (0, i)),     # points tile (lane-dense)
                pl.BlockSpec((3, 2), lambda i: (0, 0)),        # bbox (resident)
                pl.BlockSpec((8, G_pad), lambda i: (0, 0)),    # ID volume (resident, pre-bcast)
            ],
            out_specs=[
                pl.BlockSpec((8, tile), lambda i: (0, i)),     # ids, lane-dense
                pl.BlockSpec((8, tile), lambda i: (0, i)),     # weights, lane-dense
            ],
        ),
        compiler_params=pltpu.CompilerParams(
            dimension_semantics=("parallel",)),
    )(pts_t, bbox_t, table)

    if corner_major:
        return ids_t[:, :P], w_t[:, :P]
    return ids_t[:, :P].T, w_t[:, :P].T


def _reference(points, grid_id, bbox_min, bbox_max):
    """Pure-JAX reference with identical semantics (for verification)."""
    Nz, Ny, Nx = grid_id.shape
    norm = (points - bbox_min) / (bbox_max - bbox_min)
    norm = norm * 2.0 - 1.0

    def axis(col, n):
        g = (norm[:, col] + 1.0) * 0.5 * (n - 1)
        g = jnp.clip(g, 0.0, float(n - 1))
        i0 = jnp.floor(g).astype(jnp.int32)
        i0 = jnp.minimum(i0, n - 2)
        return i0, g - i0.astype(jnp.float32)

    ix0, tx = axis(0, Nx)
    iy0, ty = axis(1, Ny)
    iz0, tz = axis(2, Nz)
    gf = grid_id.reshape(-1)
    ids, ws = [], []
    for (cz, cy, cx) in _CORNERS:
        lin = (iz0 + cz) * (Ny * Nx) + (iy0 + cy) * Nx + (ix0 + cx)
        ids.append(gf[lin])
        wx = tx if cx else 1.0 - tx
        wy = ty if cy else 1.0 - ty
        wz = tz if cz else 1.0 - tz
        ws.append(wz * wy * wx)
    return jnp.stack(ids, axis=1), jnp.stack(ws, axis=1)


if __name__ == "__main__":
    key = jax.random.PRNGKey(0)
    k_vert, k_grid, k_pts = jax.random.split(key, 3)

    # Synthetic "module init" (deterministic), matching __init__ shapes:
    #   vertex [V, 3], faces [F, 3], N=8 grid, padding=0.001
    V, F, N, padding = 32, 20, 8, 0.001
    vertex = jax.random.normal(k_vert, (V, 3), dtype=jnp.float32)
    bbox_min = jnp.min(vertex, axis=0) - padding
    bbox_max = jnp.max(vertex, axis=0) + padding
    # TODO(synk): getNearestTriangleID is one-time CPU mesh preprocessing at
    # init; grid_id is synthesized deterministically here instead.
    grid_id = jax.random.randint(k_grid, (N, N, N), 0, F, dtype=jnp.int32)

    # Query points (forward input): [P, 3]; large enough to exercise multiple
    # 128-point blocks and multiple table chunks.
    P = 1000
    points = jax.random.uniform(k_pts, (P, 3), dtype=jnp.float32,
                                minval=-1.5, maxval=1.5)

    ids, w = weight_volume_index_forward(points, grid_id, bbox_min, bbox_max)
    jax.block_until_ready((ids, w))

    ids_ref, w_ref = _reference(points, grid_id, bbox_min, bbox_max)
    np.testing.assert_array_equal(np.asarray(ids), np.asarray(ids_ref))
    np.testing.assert_allclose(np.asarray(w), np.asarray(w_ref),
                               rtol=1e-5, atol=1e-5)

    print("KERNEL_OK")
</pallas_src>

<mosaic_0001>
module attributes {stable_mosaic.version = 11 : i64} {
  func.func @_weight_volume_kernel(%arg0: i32, %arg1: memref<3x1024xf32, #tpu.memory_space<vmem>>, %arg2: memref<3x2xf32, #tpu.memory_space<vmem>>, %arg3: memref<8x512xi32, #tpu.memory_space<vmem>>, %arg4: memref<8x1024xi32, #tpu.memory_space<vmem>>, %arg5: memref<8x1024xf32, #tpu.memory_space<vmem>>) attributes {dimension_semantics = [#tpu.dimension_semantics<parallel>], iteration_bounds = array<i64: 1>, scalar_prefetch = 0 : i64, scratch_operands = 0 : i64, tpu.core_type = #tpu.core_type<tc>, window_params = [{transform_indices = @transform_0, window_bounds = array<i64: 3, 1024>}, {pipeline_mode = #tpu.pipeline_mode<synchronous>, transform_indices = @transform_1, window_bounds = array<i64: 3, 2>}, {pipeline_mode = #tpu.pipeline_mode<synchronous>, transform_indices = @transform_2, window_bounds = array<i64: 8, 512>}, {transform_indices = @transform_3, window_bounds = array<i64: 8, 1024>}, {transform_indices = @transform_4, window_bounds = array<i64: 8, 1024>}]} {
    %c0 = arith.constant 0 : index
    %c0_0 = arith.constant 0 : index
    %0 = vector.load %arg2[%c0, %c0_0] : memref<3x2xf32, #tpu.memory_space<vmem>>, vector<3x2xf32>
    %1 = vector.extract_strided_slice %0 {offsets = [0, 0], sizes = [3, 1], strides = [1, 1]} : vector<3x2xf32> to vector<3x1xf32>
    %2 = vector.extract_strided_slice %0 {offsets = [0, 1], sizes = [3, 1], strides = [1, 1]} : vector<3x2xf32> to vector<3x1xf32>
    %3 = arith.subf %2, %1 : vector<3x1xf32>
    %4 = tpu.iota {dimensions = array<i32: 0>} : vector<8x1xi32>
    %c1_i32 = arith.constant 1 : i32
    %5 = vector.broadcast %c1_i32 : i32 to vector<8x1xi32>
    %6 = arith.andi %4, %5 : vector<8x1xi32>
    %c1_i32_1 = arith.constant 1 : i32
    %7 = vector.broadcast %c1_i32_1 : i32 to vector<8x1xi32>
    %8 = arith.shrsi %4, %7 : vector<8x1xi32>
    %c1_i32_2 = arith.constant 1 : i32
    %9 = vector.broadcast %c1_i32_2 : i32 to vector<8x1xi32>
    %10 = arith.andi %8, %9 : vector<8x1xi32>
    %c2_i32 = arith.constant 2 : i32
    %11 = vector.broadcast %c2_i32 : i32 to vector<8x1xi32>
    %12 = arith.shrsi %4, %11 : vector<8x1xi32>
    %c1_i32_3 = arith.constant 1 : i32
    %13 = vector.broadcast %c1_i32_3 : i32 to vector<8x1xi32>
    %14 = arith.andi %12, %13 : vector<8x1xi32>
    %c64_i32 = arith.constant 64 : i32
    %15 = vector.broadcast %c64_i32 : i32 to vector<8x1xi32>
    %16 = arith.muli %14, %15 : vector<8x1xi32>
    %c8_i32 = arith.constant 8 : i32
    %17 = vector.broadcast %c8_i32 : i32 to vector<8x1xi32>
    %18 = arith.muli %10, %17 : vector<8x1xi32>
    %19 = arith.addi %16, %18 : vector<8x1xi32>
    %20 = arith.addi %19, %6 : vector<8x1xi32>
    %c1_i32_4 = arith.constant 1 : i32
    %21 = vector.broadcast %c1_i32_4 : i32 to vector<8x1xi32>
    %22 = arith.cmpi eq, %6, %21 : vector<8x1xi32>
    %c1_i32_5 = arith.constant 1 : i32
    %23 = vector.broadcast %c1_i32_5 : i32 to vector<8x1xi32>
    %24 = arith.cmpi eq, %10, %23 : vector<8x1xi32>
    %c1_i32_6 = arith.constant 1 : i32
    %25 = vector.broadcast %c1_i32_6 : i32 to vector<8x1xi32>
    %26 = arith.cmpi eq, %14, %25 : vector<8x1xi32>
    %c0_7 = arith.constant 0 : index
    %c0_8 = arith.constant 0 : index
    %27 = vector.load %arg3[%c0_7, %c0_8] : memref<8x512xi32, #tpu.memory_space<vmem>>, vector<8x128xi32>
    %c0_9 = arith.constant 0 : index
    %c128 = arith.constant 128 : index
    %28 = vector.load %arg3[%c0_9, %c128] : memref<8x512xi32, #tpu.memory_space<vmem>>, vector<8x128xi32>
    %c0_10 = arith.constant 0 : index
    %c256 = arith.constant 256 : index
    %29 = vector.load %arg3[%c0_10, %c256] : memref<8x512xi32, #tpu.memory_space<vmem>>, vector<8x128xi32>
    %c0_11 = arith.constant 0 : index
    %c384 = arith.constant 384 : index
    %30 = vector.load %arg3[%c0_11, %c384] : memref<8x512xi32, #tpu.memory_space<vmem>>, vector<8x128xi32>
    %c0_12 = arith.constant 0 : index
    %c0_13 = arith.constant 0 : index
    %31 = vector.load %arg1[%c0_12, %c0_13] : memref<3x1024xf32, #tpu.memory_space<vmem>>, vector<3x128xf32>
    %32 = vector.broadcast %1 : vector<3x1xf32> to vector<3x128xf32>
    %33 = arith.subf %31, %32 : vector<3x128xf32>
    %34 = vector.broadcast %3 : vector<3x1xf32> to vector<3x128xf32>
    %35 = arith.divf %33, %34 : vector<3x128xf32>
    %cst = arith.constant 2.000000e+00 : f32
    %36 = vector.broadcast %cst : f32 to vector<3x128xf32>
    %37 = arith.mulf %35, %36 : vector<3x128xf32>
    %cst_14 = arith.constant 1.000000e+00 : f32
    %38 = vector.broadcast %cst_14 : f32 to vector<3x128xf32>
    %39 = arith.subf %37, %38 : vector<3x128xf32>
    %40 = vector.extract_strided_slice %39 {offsets = [0, 0], sizes = [1, 128], strides = [1, 1]} : vector<3x128xf32> to vector<1x128xf32>
    %cst_15 = arith.constant 1.000000e+00 : f32
    %41 = vector.broadcast %cst_15 : f32 to vector<1x128xf32>
    %42 = arith.addf %40, %41 : vector<1x128xf32>
    %cst_16 = arith.constant 5.000000e-01 : f32
    %43 = vector.broadcast %cst_16 : f32 to vector<1x128xf32>
    %44 = arith.mulf %42, %43 : vector<1x128xf32>
    %cst_17 = arith.constant 7.000000e+00 : f32
    %45 = vector.broadcast %cst_17 : f32 to vector<1x128xf32>
    %46 = arith.mulf %44, %45 : vector<1x128xf32>
    %cst_18 = arith.constant 0.000000e+00 : f32
    %cst_19 = arith.constant 7.000000e+00 : f32
    %47 = vector.broadcast %cst_18 : f32 to vector<1x128xf32>
    %48 = arith.maximumf %47, %46 : vector<1x128xf32>
    %49 = vector.broadcast %cst_19 : f32 to vector<1x128xf32>
    %50 = arith.minimumf %49, %48 : vector<1x128xf32>
    %51 = math.floor %50 : vector<1x128xf32>
    %52 = arith.fptosi %51 : vector<1x128xf32> to vector<1x128xi32>
    %c6_i32 = arith.constant 6 : i32
    %53 = vector.broadcast %c6_i32 : i32 to vector<1x128xi32>
    %54 = arith.minsi %52, %53 : vector<1x128xi32>
    %55 = arith.sitofp %54 : vector<1x128xi32> to vector<1x128xf32>
    %56 = arith.subf %50, %55 : vector<1x128xf32>
    %57 = vector.extract_strided_slice %39 {offsets = [1, 0], sizes = [1, 128], strides = [1, 1]} : vector<3x128xf32> to vector<1x128xf32>
    %cst_20 = arith.constant 1.000000e+00 : f32
    %58 = vector.broadcast %cst_20 : f32 to vector<1x128xf32>
    %59 = arith.addf %57, %58 : vector<1x128xf32>
    %cst_21 = arith.constant 5.000000e-01 : f32
    %60 = vector.broadcast %cst_21 : f32 to vector<1x128xf32>
    %61 = arith.mulf %59, %60 : vector<1x128xf32>
    %cst_22 = arith.constant 7.000000e+00 : f32
    %62 = vector.broadcast %cst_22 : f32 to vector<1x128xf32>
    %63 = arith.mulf %61, %62 : vector<1x128xf32>
    %cst_23 = arith.constant 0.000000e+00 : f32
    %cst_24 = arith.constant 7.000000e+00 : f32
    %64 = vector.broadcast %cst_23 : f32 to vector<1x128xf32>
    %65 = arith.maximumf %64, %63 : vector<1x128xf32>
    %66 = vector.broadcast %cst_24 : f32 to vector<1x128xf32>
    %67 = arith.minimumf %66, %65 : vector<1x128xf32>
    %68 = math.floor %67 : vector<1x128xf32>
    %69 = arith.fptosi %68 : vector<1x128xf32> to vector<1x128xi32>
    %c6_i32_25 = arith.constant 6 : i32
    %70 = vector.broadcast %c6_i32_25 : i32 to vector<1x128xi32>
    %71 = arith.minsi %69, %70 : vector<1x128xi32>
    %72 = arith.sitofp %71 : vector<1x128xi32> to vector<1x128xf32>
    %73 = arith.subf %67, %72 : vector<1x128xf32>
    %74 = vector.extract_strided_slice %39 {offsets = [2, 0], sizes = [1, 128], strides = [1, 1]} : vector<3x128xf32> to vector<1x128xf32>
    %cst_26 = arith.constant 1.000000e+00 : f32
    %75 = vector.broadcast %cst_26 : f32 to vector<1x128xf32>
    %76 = arith.addf %74, %75 : vector<1x128xf32>
    %cst_27 = arith.constant 5.000000e-01 : f32
    %77 = vector.broadcast %cst_27 : f32 to vector<1x128xf32>
    %78 = arith.mulf %76, %77 : vector<1x128xf32>
    %cst_28 = arith.constant 7.000000e+00 : f32
    %79 = vector.broadcast %cst_28 : f32 to vector<1x128xf32>
    %80 = arith.mulf %78, %79 : vector<1x128xf32>
    %cst_29 = arith.constant 0.000000e+00 : f32
    %cst_30 = arith.constant 7.000000e+00 : f32
    %81 = vector.broadcast %cst_29 : f32 to vector<1x128xf32>
    %82 = arith.maximumf %81, %80 : vector<1x128xf32>
    %83 = vector.broadcast %cst_30 : f32 to vector<1x128xf32>
    %84 = arith.minimumf %83, %82 : vector<1x128xf32>
    %85 = math.floor %84 : vector<1x128xf32>
    %86 = arith.fptosi %85 : vector<1x128xf32> to vector<1x128xi32>
    %c6_i32_31 = arith.constant 6 : i32
    %87 = vector.broadcast %c6_i32_31 : i32 to vector<1x128xi32>
    %88 = arith.minsi %86, %87 : vector<1x128xi32>
    %89 = arith.sitofp %88 : vector<1x128xi32> to vector<1x128xf32>
    %90 = arith.subf %84, %89 : vector<1x128xf32>
    %cst_32 = arith.constant 1.000000e+00 : f32
    %91 = vector.broadcast %cst_32 : f32 to vector<1x128xf32>
    %92 = arith.subf %91, %56 : vector<1x128xf32>
    %93 = vector.shape_cast %22 : vector<8x1xi1> to vector<8x1xi1>
    %94 = vector.broadcast %93 : vector<8x1xi1> to vector<8x128xi1>
    %95 = vector.shape_cast %56 : vector<1x128xf32> to vector<1x128xf32>
    %96 = vector.broadcast %95 : vector<1x128xf32> to vector<8x128xf32>
    %97 = vector.shape_cast %92 : vector<1x128xf32> to vector<1x128xf32>
    %98 = vector.broadcast %97 : vector<1x128xf32> to vector<8x128xf32>
    %99 = arith.select %94, %96, %98 : vector<8x128xi1>, vector<8x128xf32>
    %cst_33 = arith.constant 1.000000e+00 : f32
    %100 = vector.broadcast %cst_33 : f32 to vector<1x128xf32>
    %101 = arith.subf %100, %73 : vector<1x128xf32>
    %102 = vector.shape_cast %24 : vector<8x1xi1> to vector<8x1xi1>
    %103 = vector.broadcast %102 : vector<8x1xi1> to vector<8x128xi1>
    %104 = vector.shape_cast %73 : vector<1x128xf32> to vector<1x128xf32>
    %105 = vector.broadcast %104 : vector<1x128xf32> to vector<8x128xf32>
    %106 = vector.shape_cast %101 : vector<1x128xf32> to vector<1x128xf32>
    %107 = vector.broadcast %106 : vector<1x128xf32> to vector<8x128xf32>
    %108 = arith.select %103, %105, %107 : vector<8x128xi1>, vector<8x128xf32>
    %cst_34 = arith.constant 1.000000e+00 : f32
    %109 = vector.broadcast %cst_34 : f32 to vector<1x128xf32>
    %110 = arith.subf %109, %90 : vector<1x128xf32>
    %111 = vector.shape_cast %26 : vector<8x1xi1> to vector<8x1xi1>
    %112 = vector.broadcast %111 : vector<8x1xi1> to vector<8x128xi1>
    %113 = vector.shape_cast %90 : vector<1x128xf32> to vector<1x128xf32>
    %114 = vector.broadcast %113 : vector<1x128xf32> to vector<8x128xf32>
    %115 = vector.shape_cast %110 : vector<1x128xf32> to vector<1x128xf32>
    %116 = vector.broadcast %115 : vector<1x128xf32> to vector<8x128xf32>
    %117 = arith.select %112, %114, %116 : vector<8x128xi1>, vector<8x128xf32>
    %118 = arith.mulf %117, %108 : vector<8x128xf32>
    %119 = arith.mulf %118, %99 : vector<8x128xf32>
    %c0_35 = arith.constant 0 : index
    %c0_36 = arith.constant 0 : index
    %120 = vector.load %arg5[%c0_35, %c0_36] : memref<8x1024xf32, #tpu.memory_space<vmem>>, vector<8x128xf32>
    tpu.vector_store %arg5[%c0_35, %c0_36], %119 {strides = array<i32>} : memref<8x1024xf32, #tpu.memory_space<vmem>>, vector<8x128xf32>,
    %c64_i32_37 = arith.constant 64 : i32
    %121 = vector.broadcast %c64_i32_37 : i32 to vector<1x128xi32>
    %122 = arith.muli %88, %121 : vector<1x128xi32>
    %c8_i32_38 = arith.constant 8 : i32
    %123 = vector.broadcast %c8_i32_38 : i32 to vector<1x128xi32>
    %124 = arith.muli %71, %123 : vector<1x128xi32>
    %125 = arith.addi %122, %124 : vector<1x128xi32>
    %126 = arith.addi %125, %54 : vector<1x128xi32>
    %127 = vector.broadcast %126 : vector<1x128xi32> to vector<8x128xi32>
    %128 = vector.broadcast %20 : vector<8x1xi32> to vector<8x128xi32>
    %129 = arith.addi %127, %128 : vector<8x128xi32>
    %c7_i32 = arith.constant 7 : i32
    %130 = vector.broadcast %c7_i32 : i32 to vector<8x128xi32>
    %131 = arith.shrsi %129, %130 : vector<8x128xi32>
    %c127_i32 = arith.constant 127 : i32
    %132 = vector.broadcast %c127_i32 : i32 to vector<8x128xi32>
    %133 = arith.andi %129, %132 : vector<8x128xi32>
    %134 = vector.shape_cast %133 : vector<8x128xi32> to vector<8x128x1xi32>
    %135 = vector.shape_cast %134 : vector<8x128x1xi32> to vector<8x128xi32>
    %136 = tpu.dynamic_gather %27[%135] in [1] : vector<8x128xi32>, vector<8x128xi32> -> vector<8x128xi32>
    %137 = vector.shape_cast %133 : vector<8x128xi32> to vector<8x128x1xi32>
    %138 = vector.shape_cast %137 : vector<8x128x1xi32> to vector<8x128xi32>
    %139 = tpu.dynamic_gather %28[%138] in [1] : vector<8x128xi32>, vector<8x128xi32> -> vector<8x128xi32>
    %c1_i32_39 = arith.constant 1 : i32
    %140 = vector.broadcast %c1_i32_39 : i32 to vector<8x128xi32>
    %141 = arith.cmpi eq, %131, %140 : vector<8x128xi32>
    %142 = arith.select %141, %139, %136 : vector<8x128xi1>, vector<8x128xi32>
    %143 = vector.shape_cast %133 : vector<8x128xi32> to vector<8x128x1xi32>
    %144 = vector.shape_cast %143 : vector<8x128x1xi32> to vector<8x128xi32>
    %145 = tpu.dynamic_gather %29[%144] in [1] : vector<8x128xi32>, vector<8x128xi32> -> vector<8x128xi32>
    %c2_i32_40 = arith.constant 2 : i32
    %146 = vector.broadcast %c2_i32_40 : i32 to vector<8x128xi32>
    %147 = arith.cmpi eq, %131, %146 : vector<8x128xi32>
    %148 = arith.select %147, %145, %142 : vector<8x128xi1>, vector<8x128xi32>
    %149 = vector.shape_cast %133 : vector<8x128xi32> to vector<8x128x1xi32>
    %150 = vector.shape_cast %149 : vector<8x128x1xi32> to vector<8x128xi32>
    %151 = tpu.dynamic_gather %30[%150] in [1] : vector<8x128xi32>, vector<8x128xi32> -> vector<8x128xi32>
    %c3_i32 = arith.constant 3 : i32
    %152 = vector.broadcast %c3_i32 : i32 to vector<8x128xi32>
    %153 = arith.cmpi eq, %131, %152 : vector<8x128xi32>
    %154 = arith.select %153, %151, %148 : vector<8x128xi1>, vector<8x128xi32>
    %c0_41 = arith.constant 0 : index
    %c0_42 = arith.constant 0 : index
    %155 = vector.load %arg4[%c0_41, %c0_42] : memref<8x1024xi32, #tpu.memory_space<vmem>>, vector<8x128xi32>
    tpu.vector_store %arg4[%c0_41, %c0_42], %154 {strides = array<i32>} : memref<8x1024xi32, #tpu.memory_space<vmem>>, vector<8x128xi32>,
    %c0_43 = arith.constant 0 : index
    %c128_44 = arith.constant 128 : index
    %156 = vector.load %arg1[%c0_43, %c128_44] : memref<3x1024xf32, #tpu.memory_space<vmem>>, vector<3x128xf32>
    %157 = vector.broadcast %1 : vector<3x1xf32> to vector<3x128xf32>
    %158 = arith.subf %156, %157 : vector<3x128xf32>
    %159 = vector.broadcast %3 : vector<3x1xf32> to vector<3x128xf32>
    %160 = arith.divf %158, %159 : vector<3x128xf32>
    %cst_45 = arith.constant 2.000000e+00 : f32
    %161 = vector.broadcast %cst_45 : f32 to vector<3x128xf32>
    %162 = arith.mulf %160, %161 : vector<3x128xf32>
    %cst_46 = arith.constant 1.000000e+00 : f32
    %163 = vector.broadcast %cst_46 : f32 to vector<3x128xf32>
    %164 = arith.subf %162, %163 : vector<3x128xf32>
    %165 = vector.extract_strided_slice %164 {offsets = [0, 0], sizes = [1, 128], strides = [1, 1]} : vector<3x128xf32> to vector<1x128xf32>
    %cst_47 = arith.constant 1.000000e+00 : f32
    %166 = vector.broadcast %cst_47 : f32 to vector<1x128xf32>
    %167 = arith.addf %165, %166 : vector<1x128xf32>
    %cst_48 = arith.constant 5.000000e-01 : f32
    %168 = vector.broadcast %cst_48 : f32 to vector<1x128xf32>
    %169 = arith.mulf %167, %168 : vector<1x128xf32>
    %cst_49 = arith.constant 7.000000e+00 : f32
    %170 = vector.broadcast %cst_49 : f32 to vector<1x128xf32>
    %171 = arith.mulf %169, %170 : vector<1x128xf32>
    %cst_50 = arith.constant 0.000000e+00 : f32
    %cst_51 = arith.constant 7.000000e+00 : f32
    %172 = vector.broadcast %cst_50 : f32 to vector<1x128xf32>
    %173 = arith.maximumf %172, %171 : vector<1x128xf32>
    %174 = vector.broadcast %cst_51 : f32 to vector<1x128xf32>
    %175 = arith.minimumf %174, %173 : vector<1x128xf32>
    %176 = math.floor %175 : vector<1x128xf32>
    %177 = arith.fptosi %176 : vector<1x128xf32> to vector<1x128xi32>
    %c6_i32_52 = arith.constant 6 : i32
    %178 = vector.broadcast %c6_i32_52 : i32 to vector<1x128xi32>
    %179 = arith.minsi %177, %178 : vector<1x128xi32>
    %180 = arith.sitofp %179 : vector<1x128xi32> to vector<1x128xf32>
    %181 = arith.subf %175, %180 : vector<1x128xf32>
    %182 = vector.extract_strided_slice %164 {offsets = [1, 0], sizes = [1, 128], strides = [1, 1]} : vector<3x128xf32> to vector<1x128xf32>
    %cst_53 = arith.constant 1.000000e+00 : f32
    %183 = vector.broadcast %cst_53 : f32 to vector<1x128xf32>
    %184 = arith.addf %182, %183 : vector<1x128xf32>
    %cst_54 = arith.constant 5.000000e-01 : f32
    %185 = vector.broadcast %cst_54 : f32 to vector<1x128xf32>
    %186 = arith.mulf %184, %185 : vector<1x128xf32>
    %cst_55 = arith.constant 7.000000e+00 : f32
    %187 = vector.broadcast %cst_55 : f32 to vector<1x128xf32>
    %188 = arith.mulf %186, %187 : vector<1x128xf32>
    %cst_56 = arith.constant 0.000000e+00 : f32
    %cst_57 = arith.constant 7.000000e+00 : f32
    %189 = vector.broadcast %cst_56 : f32 to vector<1x128xf32>
    %190 = arith.maximumf %189, %188 : vector<1x128xf32>
    %191 = vector.broadcast %cst_57 : f32 to vector<1x128xf32>
    %192 = arith.minimumf %191, %190 : vector<1x128xf32>
    %193 = math.floor %192 : vector<1x128xf32>
    %194 = arith.fptosi %193 : vector<1x128xf32> to vector<1x128xi32>
    %c6_i32_58 = arith.constant 6 : i32
    %195 = vector.broadcast %c6_i32_58 : i32 to vector<1x128xi32>
    %196 = arith.minsi %194, %195 : vector<1x128xi32>
    %197 = arith.sitofp %196 : vector<1x128xi32> to vector<1x128xf32>
    %198 = arith.subf %192, %197 : vector<1x128xf32>
    %199 = vector.extract_strided_slice %164 {offsets = [2, 0], sizes = [1, 128], strides = [1, 1]} : vector<3x128xf32> to vector<1x128xf32>
    %cst_59 = arith.constant 1.000000e+00 : f32
    %200 = vector.broadcast %cst_59 : f32 to vector<1x128xf32>
    %201 = arith.addf %199, %200 : vector<1x128xf32>
    %cst_60 = arith.constant 5.000000e-01 : f32
    %202 = vector.broadcast %cst_60 : f32 to vector<1x128xf32>
    %203 = arith.mulf %201, %202 : vector<1x128xf32>
    %cst_61 = arith.constant 7.000000e+00 : f32
    %204 = vector.broadcast %cst_61 : f32 to vector<1x128xf32>
    %205 = arith.mulf %203, %204 : vector<1x128xf32>
    %cst_62 = arith.constant 0.000000e+00 : f32
    %cst_63 = arith.constant 7.000000e+00 : f32
    %206 = vector.broadcast %cst_62 : f32 to vector<1x128xf32>
    %207 = arith.maximumf %206, %205 : vector<1x128xf32>
    %208 = vector.broadcast %cst_63 : f32 to vector<1x128xf32>
    %209 = arith.minimumf %208, %207 : vector<1x128xf32>
    %210 = math.floor %209 : vector<1x128xf32>
    %211 = arith.fptosi %210 : vector<1x128xf32> to vector<1x128xi32>
    %c6_i32_64 = arith.constant 6 : i32
    %212 = vector.broadcast %c6_i32_64 : i32 to vector<1x128xi32>
    %213 = arith.minsi %211, %212 : vector<1x128xi32>
    %214 = arith.sitofp %213 : vector<1x128xi32> to vector<1x128xf32>
    %215 = arith.subf %209, %214 : vector<1x128xf32>
    %cst_65 = arith.constant 1.000000e+00 : f32
    %216 = vector.broadcast %cst_65 : f32 to vector<1x128xf32>
    %217 = arith.subf %216, %181 : vector<1x128xf32>
    %218 = vector.shape_cast %22 : vector<8x1xi1> to vector<8x1xi1>
    %219 = vector.broadcast %218 : vector<8x1xi1> to vector<8x128xi1>
    %220 = vector.shape_cast %181 : vector<1x128xf32> to vector<1x128xf32>
    %221 = vector.broadcast %220 : vector<1x128xf32> to vector<8x128xf32>
    %222 = vector.shape_cast %217 : vector<1x128xf32> to vector<1x128xf32>
    %223 = vector.broadcast %222 : vector<1x128xf32> to vector<8x128xf32>
    %224 = arith.select %219, %221, %223 : vector<8x128xi1>, vector<8x128xf32>
    %cst_66 = arith.constant 1.000000e+00 : f32
    %225 = vector.broadcast %cst_66 : f32 to vector<1x128xf32>
    %226 = arith.subf %225, %198 : vector<1x128xf32>
    %227 = vector.shape_cast %24 : vector<8x1xi1> to vector<8x1xi1>
    %228 = vector.broadcast %227 : vector<8x1xi1> to vector<8x128xi1>
    %229 = vector.shape_cast %198 : vector<1x128xf32> to vector<1x128xf32>
    %230 = vector.broadcast %229 : vector<1x128xf32> to vector<8x128xf32>
    %231 = vector.shape_cast %226 : vector<1x128xf32> to vector<1x128xf32>
    %232 = vector.broadcast %231 : vector<1x128xf32> to vector<8x128xf32>
    %233 = arith.select %228, %230, %232 : vector<8x128xi1>, vector<8x128xf32>
    %cst_67 = arith.constant 1.000000e+00 : f32
    %234 = vector.broadcast %cst_67 : f32 to vector<1x128xf32>
    %235 = arith.subf %234, %215 : vector<1x128xf32>
    %236 = vector.shape_cast %26 : vector<8x1xi1> to vector<8x1xi1>
    %237 = vector.broadcast %236 : vector<8x1xi1> to vector<8x128xi1>
    %238 = vector.shape_cast %215 : vector<1x128xf32> to vector<1x128xf32>
    %239 = vector.broadcast %238 : vector<1x128xf32> to vector<8x128xf32>
    %240 = vector.shape_cast %235 : vector<1x128xf32> to vector<1x128xf32>
    %241 = vector.broadcast %240 : vector<1x128xf32> to vector<8x128xf32>
    %242 = arith.select %237, %239, %241 : vector<8x128xi1>, vector<8x128xf32>
    %243 = arith.mulf %242, %233 : vector<8x128xf32>
    %244 = arith.mulf %243, %224 : vector<8x128xf32>
    %c0_68 = arith.constant 0 : index
    %c128_69 = arith.constant 128 : index
    %245 = vector.load %arg5[%c0_68, %c128_69] : memref<8x1024xf32, #tpu.memory_space<vmem>>, vector<8x128xf32>
    tpu.vector_store %arg5[%c0_68, %c128_69], %244 {strides = array<i32>} : memref<8x1024xf32, #tpu.memory_space<vmem>>, vector<8x128xf32>,
    %c64_i32_70 = arith.constant 64 : i32
    %246 = vector.broadcast %c64_i32_70 : i32 to vector<1x128xi32>
    %247 = arith.muli %213, %246 : vector<1x128xi32>
    %c8_i32_71 = arith.constant 8 : i32
    %248 = vector.broadcast %c8_i32_71 : i32 to vector<1x128xi32>
    %249 = arith.muli %196, %248 : vector<1x128xi32>
    %250 = arith.addi %247, %249 : vector<1x128xi32>
    %251 = arith.addi %250, %179 : vector<1x128xi32>
    %252 = vector.broadcast %251 : vector<1x128xi32> to vector<8x128xi32>
    %253 = vector.broadcast %20 : vector<8x1xi32> to vector<8x128xi32>
    %254 = arith.addi %252, %253 : vector<8x128xi32>
    %c7_i32_72 = arith.constant 7 : i32
    %255 = vector.broadcast %c7_i32_72 : i32 to vector<8x128xi32>
    %256 = arith.shrsi %254, %255 : vector<8x128xi32>
    %c127_i32_73 = arith.constant 127 : i32
    %257 = vector.broadcast %c127_i32_73 : i32 to vector<8x128xi32>
    %258 = arith.andi %254, %257 : vector<8x128xi32>
    %259 = vector.shape_cast %258 : vector<8x128xi32> to vector<8x128x1xi32>
    %260 = vector.shape_cast %259 : vector<8x128x1xi32> to vector<8x128xi32>
    %261 = tpu.dynamic_gather %27[%260] in [1] : vector<8x128xi32>, vector<8x128xi32> -> vector<8x128xi32>
    %262 = vector.shape_cast %258 : vector<8x128xi32> to vector<8x128x1xi32>
    %263 = vector.shape_cast %262 : vector<8x128x1xi32> to vector<8x128xi32>
    %264 = tpu.dynamic_gather %28[%263] in [1] : vector<8x128xi32>, vector<8x128xi32> -> vector<8x128xi32>
    %c1_i32_74 = arith.constant 1 : i32
    %265 = vector.broadcast %c1_i32_74 : i32 to vector<8x128xi32>
    %266 = arith.cmpi eq, %256, %265 : vector<8x128xi32>
    %267 = arith.select %266, %264, %261 : vector<8x128xi1>, vector<8x128xi32>
    %268 = vector.shape_cast %258 : vector<8x128xi32> to vector<8x128x1xi32>
    %269 = vector.shape_cast %268 : vector<8x128x1xi32> to vector<8x128xi32>
    %270 = tpu.dynamic_gather %29[%269] in [1] : vector<8x128xi32>, vector<8x128xi32> -> vector<8x128xi32>
    %c2_i32_75 = arith.constant 2 : i32
    %271 = vector.broadcast %c2_i32_75 : i32 to vector<8x128xi32>
    %272 = arith.cmpi eq, %256, %271 : vector<8x128xi32>
    %273 = arith.select %272, %270, %267 : vector<8x128xi1>, vector<8x128xi32>
    %274 = vector.shape_cast %258 : vector<8x128xi32> to vector<8x128x1xi32>
    %275 = vector.shape_cast %274 : vector<8x128x1xi32> to vector<8x128xi32>
    %276 = tpu.dynamic_gather %30[%275] in [1] : vector<8x128xi32>, vector<8x128xi32> -> vector<8x128xi32>
    %c3_i32_76 = arith.constant 3 : i32
    %277 = vector.broadcast %c3_i32_76 : i32 to vector<8x128xi32>
    %278 = arith.cmpi eq, %256, %277 : vector<8x128xi32>
    %279 = arith.select %278, %276, %273 : vector<8x128xi1>, vector<8x128xi32>
    %c0_77 = arith.constant 0 : index
    %c128_78 = arith.constant 128 : index
    %280 = vector.load %arg4[%c0_77, %c128_78] : memref<8x1024xi32, #tpu.memory_space<vmem>>, vector<8x128xi32>
    tpu.vector_store %arg4[%c0_77, %c128_78], %279 {strides = array<i32>} : memref<8x1024xi32, #tpu.memory_space<vmem>>, vector<8x128xi32>,
    %c0_79 = arith.constant 0 : index
    %c256_80 = arith.constant 256 : index
    %281 = vector.load %arg1[%c0_79, %c256_80] : memref<3x1024xf32, #tpu.memory_space<vmem>>, vector<3x128xf32>
    %282 = vector.broadcast %1 : vector<3x1xf32> to vector<3x128xf32>
    %283 = arith.subf %281, %282 : vector<3x128xf32>
    %284 = vector.broadcast %3 : vector<3x1xf32> to vector<3x128xf32>
    %285 = arith.divf %283, %284 : vector<3x128xf32>
    %cst_81 = arith.constant 2.000000e+00 : f32
    %286 = vector.broadcast %cst_81 : f32 to vector<3x128xf32>
    %287 = arith.mulf %285, %286 : vector<3x128xf32>
    %cst_82 = arith.constant 1.000000e+00 : f32
    %288 = vector.broadcast %cst_82 : f32 to vector<3x128xf32>
    %289 = arith.subf %287, %288 : vector<3x128xf32>
    %290 = vector.extract_strided_slice %289 {offsets = [0, 0], sizes = [1, 128], strides = [1, 1]} : vector<3x128xf32> to vector<1x128xf32>
    %cst_83 = arith.constant 1.000000e+00 : f32
    %291 = vector.broadcast %cst_83 : f32 to vector<1x128xf32>
    %292 = arith.addf %290, %291 : vector<1x128xf32>
    %cst_84 = arith.constant 5.000000e-01 : f32
    %293 = vector.broadcast %cst_84 : f32 to vector<1x128xf32>
    %294 = arith.mulf %292, %293 : vector<1x128xf32>
    %cst_85 = arith.constant 7.000000e+00 : f32
    %295 = vector.broadcast %cst_85 : f32 to vector<1x128xf32>
    %296 = arith.mulf %294, %295 : vector<1x128xf32>
    %cst_86 = arith.constant 0.000000e+00 : f32
    %cst_87 = arith.constant 7.000000e+00 : f32
    %297 = vector.broadcast %cst_86 : f32 to vector<1x128xf32>
    %298 = arith.maximumf %297, %296 : vector<1x128xf32>
    %299 = vector.broadcast %cst_87 : f32 to vector<1x128xf32>
    %300 = arith.minimumf %299, %298 : vector<1x128xf32>
    %301 = math.floor %300 : vector<1x128xf32>
    %302 = arith.fptosi %301 : vector<1x128xf32> to vector<1x128xi32>
    %c6_i32_88 = arith.constant 6 : i32
    %303 = vector.broadcast %c6_i32_88 : i32 to vector<1x128xi32>
    %304 = arith.minsi %302, %303 : vector<1x128xi32>
    %305 = arith.sitofp %304 : vector<1x128xi32> to vector<1x128xf32>
    %306 = arith.subf %300, %305 : vector<1x128xf32>
    %307 = vector.extract_strided_slice %289 {offsets = [1, 0], sizes = [1, 128], strides = [1, 1]} : vector<3x128xf32> to vector<1x128xf32>
    %cst_89 = arith.constant 1.000000e+00 : f32
    %308 = vector.broadcast %cst_89 : f32 to vector<1x128xf32>
    %309 = arith.addf %307, %308 : vector<1x128xf32>
    %cst_90 = arith.constant 5.000000e-01 : f32
    %310 = vector.broadcast %cst_90 : f32 to vector<1x128xf32>
    %311 = arith.mulf %309, %310 : vector<1x128xf32>
    %cst_91 = arith.constant 7.000000e+00 : f32
    %312 = vector.broadcast %cst_91 : f32 to vector<1x128xf32>
    %313 = arith.mulf %311, %312 : vector<1x128xf32>
    %cst_92 = arith.constant 0.000000e+00 : f32
    %cst_93 = arith.constant 7.000000e+00 : f32
    %314 = vector.broadcast %cst_92 : f32 to vector<1x128xf32>
    %315 = arith.maximumf %314, %313 : vector<1x128xf32>
    %316 = vector.broadcast %cst_93 : f32 to vector<1x128xf32>
    %317 = arith.minimumf %316, %315 : vector<1x128xf32>
    %318 = math.floor %317 : vector<1x128xf32>
    %319 = arith.fptosi %318 : vector<1x128xf32> to vector<1x128xi32>
    %c6_i32_94 = arith.constant 6 : i32
    %320 = vector.broadcast %c6_i32_94 : i32 to vector<1x128xi32>
    %321 = arith.minsi %319, %320 : vector<1x128xi32>
    %322 = arith.sitofp %321 : vector<1x128xi32> to vector<1x128xf32>
    %323 = arith.subf %317, %322 : vector<1x128xf32>
    %324 = vector.extract_strided_slice %289 {offsets = [2, 0], sizes = [1, 128], strides = [1, 1]} : vector<3x128xf32> to vector<1x128xf32>
    %cst_95 = arith.constant 1.000000e+00 : f32
    %325 = vector.broadcast %cst_95 : f32 to vector<1x128xf32>
    %326 = arith.addf %324, %325 : vector<1x128xf32>
    %cst_96 = arith.constant 5.000000e-01 : f32
    %327 = vector.broadcast %cst_96 : f32 to vector<1x128xf32>
    %328 = arith.mulf %326, %327 : vector<1x128xf32>
    %cst_97 = arith.constant 7.000000e+00 : f32
    %329 = vector.broadcast %cst_97 : f32 to vector<1x128xf32>
    %330 = arith.mulf %328, %329 : vector<1x128xf32>
    %cst_98 = arith.constant 0.000000e+00 : f32
    %cst_99 = arith.constant 7.000000e+00 : f32
    %331 = vector.broadcast %cst_98 : f32 to vector<1x128xf32>
    %332 = arith.maximumf %331, %330 : vector<1x128xf32>
    %333 = vector.broadcast %cst_99 : f32 to vector<1x128xf32>
    %334 = arith.minimumf %333, %332 : vector<1x128xf32>
    %335 = math.floor %334 : vector<1x128xf32>
    %336 = arith.fptosi %335 : vector<1x128xf32> to vector<1x128xi32>
    %c6_i32_100 = arith.constant 6 : i32
    %337 = vector.broadcast %c6_i32_100 : i32 to vector<1x128xi32>
    %338 = arith.minsi %336, %337 : vector<1x128xi32>
    %339 = arith.sitofp %338 : vector<1x128xi32> to vector<1x128xf32>
    %340 = arith.subf %334, %339 : vector<1x128xf32>
    %cst_101 = arith.constant 1.000000e+00 : f32
    %341 = vector.broadcast %cst_101 : f32 to vector<1x128xf32>
    %342 = arith.subf %341, %306 : vector<1x128xf32>
    %343 = vector.shape_cast %22 : vector<8x1xi1> to vector<8x1xi1>
    %344 = vector.broadcast %343 : vector<8x1xi1> to vector<8x128xi1>
    %345 = vector.shape_cast %306 : vector<1x128xf32> to vector<1x128xf32>
    %346 = vector.broadcast %345 : vector<1x128xf32> to vector<8x128xf32>
    %347 = vector.shape_cast %342 : vector<1x128xf32> to vector<1x128xf32>
    %348 = vector.broadcast %347 : vector<1x128xf32> to vector<8x128xf32>
    %349 = arith.select %344, %346, %348 : vector<8x128xi1>, vector<8x128xf32>
    %cst_102 = arith.constant 1.000000e+00 : f32
    %350 = vector.broadcast %cst_102 : f32 to vector<1x128xf32>
    %351 = arith.subf %350, %323 : vector<1x128xf32>
    %352 = vector.shape_cast %24 : vector<8x1xi1> to vector<8x1xi1>
    %353 = vector.broadcast %352 : vector<8x1xi1> to vector<8x128xi1>
    %354 = vector.shape_cast %323 : vector<1x128xf32> to vector<1x128xf32>
    %355 = vector.broadcast %354 : vector<1x128xf32> to vector<8x128xf32>
    %356 = vector.shape_cast %351 : vector<1x128xf32> to vector<1x128xf32>
    %357 = vector.broadcast %356 : vector<1x128xf32> to vector<8x128xf32>
    %358 = arith.select %353, %355, %357 : vector<8x128xi1>, vector<8x128xf32>
    %cst_103 = arith.constant 1.000000e+00 : f32
    %359 = vector.broadcast %cst_103 : f32 to vector<1x128xf32>
    %360 = arith.subf %359, %340 : vector<1x128xf32>
    %361 = vector.shape_cast %26 : vector<8x1xi1> to vector<8x1xi1>
    %362 = vector.broadcast %361 : vector<8x1xi1> to vector<8x128xi1>
    %363 = vector.shape_cast %340 : vector<1x128xf32> to vector<1x128xf32>
    %364 = vector.broadcast %363 : vector<1x128xf32> to vector<8x128xf32>
    %365 = vector.shape_cast %360 : vector<1x128xf32> to vector<1x128xf32>
    %366 = vector.broadcast %365 : vector<1x128xf32> to vector<8x128xf32>
    %367 = arith.select %362, %364, %366 : vector<8x128xi1>, vector<8x128xf32>
    %368 = arith.mulf %367, %358 : vector<8x128xf32>
    %369 = arith.mulf %368, %349 : vector<8x128xf32>
    %c0_104 = arith.constant 0 : index
    %c256_105 = arith.constant 256 : index
    %370 = vector.load %arg5[%c0_104, %c256_105] : memref<8x1024xf32, #tpu.memory_space<vmem>>, vector<8x128xf32>
    tpu.vector_store %arg5[%c0_104, %c256_105], %369 {strides = array<i32>} : memref<8x1024xf32, #tpu.memory_space<vmem>>, vector<8x128xf32>,
    %c64_i32_106 = arith.constant 64 : i32
    %371 = vector.broadcast %c64_i32_106 : i32 to vector<1x128xi32>
    %372 = arith.muli %338, %371 : vector<1x128xi32>
    %c8_i32_107 = arith.constant 8 : i32
    %373 = vector.broadcast %c8_i32_107 : i32 to vector<1x128xi32>
    %374 = arith.muli %321, %373 : vector<1x128xi32>
    %375 = arith.addi %372, %374 : vector<1x128xi32>
    %376 = arith.addi %375, %304 : vector<1x128xi32>
    %377 = vector.broadcast %376 : vector<1x128xi32> to vector<8x128xi32>
    %378 = vector.broadcast %20 : vector<8x1xi32> to vector<8x128xi32>
    %379 = arith.addi %377, %378 : vector<8x128xi32>
    %c7_i32_108 = arith.constant 7 : i32
    %380 = vector.broadcast %c7_i32_108 : i32 to vector<8x128xi32>
    %381 = arith.shrsi %379, %380 : vector<8x128xi32>
    %c127_i32_109 = arith.constant 127 : i32
    %382 = vector.broadcast %c127_i32_109 : i32 to vector<8x128xi32>
    %383 = arith.andi %379, %382 : vector<8x128xi32>
    %384 = vector.shape_cast %383 : vector<8x128xi32> to vector<8x128x1xi32>
    %385 = vector.shape_cast %384 : vector<8x128x1xi32> to vector<8x128xi32>
    %386 = tpu.dynamic_gather %27[%385] in [1] : vector<8x128xi32>, vector<8x128xi32> -> vector<8x128xi32>
    %387 = vector.shape_cast %383 : vector<8x128xi32> to vector<8x128x1xi32>
    %388 = vector.shape_cast %387 : vector<8x128x1xi32> to vector<8x128xi32>
    %389 = tpu.dynamic_gather %28[%388] in [1] : vector<8x128xi32>, vector<8x128xi32> -> vector<8x128xi32>
    %c1_i32_110 = arith.constant 1 : i32
    %390 = vector.broadcast %c1_i32_110 : i32 to vector<8x128xi32>
    %391 = arith.cmpi eq, %381, %390 : vector<8x128xi32>
    %392 = arith.select %391, %389, %386 : vector<8x128xi1>, vector<8x128xi32>
    %393 = vector.shape_cast %383 : vector<8x128xi32> to vector<8x128x1xi32>
    %394 = vector.shape_cast %393 : vector<8x128x1xi32> to vector<8x128xi32>
    %395 = tpu.dynamic_gather %29[%394] in [1] : vector<8x128xi32>, vector<8x128xi32> -> vector<8x128xi32>
    %c2_i32_111 = arith.constant 2 : i32
    %396 = vector.broadcast %c2_i32_111 : i32 to vector<8x128xi32>
    %397 = arith.cmpi eq, %381, %396 : vector<8x128xi32>
    %398 = arith.select %397, %395, %392 : vector<8x128xi1>, vector<8x128xi32>
    %399 = vector.shape_cast %383 : vector<8x128xi32> to vector<8x128x1xi32>
    %400 = vector.shape_cast %399 : vector<8x128x1xi32> to vector<8x128xi32>
    %401 = tpu.dynamic_gather %30[%400] in [1] : vector<8x128xi32>, vector<8x128xi32> -> vector<8x128xi32>
    %c3_i32_112 = arith.constant 3 : i32
    %402 = vector.broadcast %c3_i32_112 : i32 to vector<8x128xi32>
    %403 = arith.cmpi eq, %381, %402 : vector<8x128xi32>
    %404 = arith.select %403, %401, %398 : vector<8x128xi1>, vector<8x128xi32>
    %c0_113 = arith.constant 0 : index
    %c256_114 = arith.constant 256 : index
    %405 = vector.load %arg4[%c0_113, %c256_114] : memref<8x1024xi32, #tpu.memory_space<vmem>>, vector<8x128xi32>
    tpu.vector_store %arg4[%c0_113, %c256_114], %404 {strides = array<i32>} : memref<8x1024xi32, #tpu.memory_space<vmem>>, vector<8x128xi32>,
    %c0_115 = arith.constant 0 : index
    %c384_116 = arith.constant 384 : index
    %406 = vector.load %arg1[%c0_115, %c384_116] : memref<3x1024xf32, #tpu.memory_space<vmem>>, vector<3x128xf32>
    %407 = vector.broadcast %1 : vector<3x1xf32> to vector<3x128xf32>
    %408 = arith.subf %406, %407 : vector<3x128xf32>
    %409 = vector.broadcast %3 : vector<3x1xf32> to vector<3x128xf32>
    %410 = arith.divf %408, %409 : vector<3x128xf32>
    %cst_117 = arith.constant 2.000000e+00 : f32
    %411 = vector.broadcast %cst_117 : f32 to vector<3x128xf32>
    %412 = arith.mulf %410, %411 : vector<3x128xf32>
    %cst_118 = arith.constant 1.000000e+00 : f32
    %413 = vector.broadcast %cst_118 : f32 to vector<3x128xf32>
    %414 = arith.subf %412, %413 : vector<3x128xf32>
    %415 = vector.extract_strided_slice %414 {offsets = [0, 0], sizes = [1, 128], strides = [1, 1]} : vector<3x128xf32> to vector<1x128xf32>
    %cst_119 = arith.constant 1.000000e+00 : f32
    %416 = vector.broadcast %cst_119 : f32 to vector<1x128xf32>
    %417 = arith.addf %415, %416 : vector<1x128xf32>
    %cst_120 = arith.constant 5.000000e-01 : f32
    %418 = vector.broadcast %cst_120 : f32 to vector<1x128xf32>
    %419 = arith.mulf %417, %418 : vector<1x128xf32>
    %cst_121 = arith.constant 7.000000e+00 : f32
    %420 = vector.broadcast %cst_121 : f32 to vector<1x128xf32>
    %421 = arith.mulf %419, %420 : vector<1x128xf32>
    %cst_122 = arith.constant 0.000000e+00 : f32
    %cst_123 = arith.constant 7.000000e+00 : f32
    %422 = vector.broadcast %cst_122 : f32 to vector<1x128xf32>
    %423 = arith.maximumf %422, %421 : vector<1x128xf32>
    %424 = vector.broadcast %cst_123 : f32 to vector<1x128xf32>
    %425 = arith.minimumf %424, %423 : vector<1x128xf32>
    %426 = math.floor %425 : vector<1x128xf32>
    %427 = arith.fptosi %426 : vector<1x128xf32> to vector<1x128xi32>
    %c6_i32_124 = arith.constant 6 : i32
    %428 = vector.broadcast %c6_i32_124 : i32 to vector<1x128xi32>
    %429 = arith.minsi %427, %428 : vector<1x128xi32>
    %430 = arith.sitofp %429 : vector<1x128xi32> to vector<1x128xf32>
    %431 = arith.subf %425, %430 : vector<1x128xf32>
    %432 = vector.extract_strided_slice %414 {offsets = [1, 0], sizes = [1, 128], strides = [1, 1]} : vector<3x128xf32> to vector<1x128xf32>
    %cst_125 = arith.constant 1.000000e+00 : f32
    %433 = vector.broadcast %cst_125 : f32 to vector<1x128xf32>
    %434 = arith.addf %432, %433 : vector<1x128xf32>
    %cst_126 = arith.constant 5.000000e-01 : f32
    %435 = vector.broadcast %cst_126 : f32 to vector<1x128xf32>
    %436 = arith.mulf %434, %435 : vector<1x128xf32>
    %cst_127 = arith.constant 7.000000e+00 : f32
    %437 = vector.broadcast %cst_127 : f32 to vector<1x128xf32>
    %438 = arith.mulf %436, %437 : vector<1x128xf32>
    %cst_128 = arith.constant 0.000000e+00 : f32
    %cst_129 = arith.constant 7.000000e+00 : f32
    %439 = vector.broadcast %cst_128 : f32 to vector<1x128xf32>
    %440 = arith.maximumf %439, %438 : vector<1x128xf32>
    %441 = vector.broadcast %cst_129 : f32 to vector<1x128xf32>
    %442 = arith.minimumf %441, %440 : vector<1x128xf32>
    %443 = math.floor %442 : vector<1x128xf32>
    %444 = arith.fptosi %443 : vector<1x128xf32> to vector<1x128xi32>
    %c6_i32_130 = arith.constant 6 : i32
    %445 = vector.broadcast %c6_i32_130 : i32 to vector<1x128xi32>
    %446 = arith.minsi %444, %445 : vector<1x128xi32>
    %447 = arith.sitofp %446 : vector<1x128xi32> to vector<1x128xf32>
    %448 = arith.subf %442, %447 : vector<1x128xf32>
    %449 = vector.extract_strided_slice %414 {offsets = [2, 0], sizes = [1, 128], strides = [1, 1]} : vector<3x128xf32> to vector<1x128xf32>
    %cst_131 = arith.constant 1.000000e+00 : f32
    %450 = vector.broadcast %cst_131 : f32 to vector<1x128xf32>
    %451 = arith.addf %449, %450 : vector<1x128xf32>
    %cst_132 = arith.constant 5.000000e-01 : f32
    %452 = vector.broadcast %cst_132 : f32 to vector<1x128xf32>
    %453 = arith.mulf %451, %452 : vector<1x128xf32>
    %cst_133 = arith.constant 7.000000e+00 : f32
    %454 = vector.broadcast %cst_133 : f32 to vector<1x128xf32>
    %455 = arith.mulf %453, %454 : vector<1x128xf32>
    %cst_134 = arith.constant 0.000000e+00 : f32
    %cst_135 = arith.constant 7.000000e+00 : f32
    %456 = vector.broadcast %cst_134 : f32 to vector<1x128xf32>
    %457 = arith.maximumf %456, %455 : vector<1x128xf32>
    %458 = vector.broadcast %cst_135 : f32 to vector<1x128xf32>
    %459 = arith.minimumf %458, %457 : vector<1x128xf32>
    %460 = math.floor %459 : vector<1x128xf32>
    %461 = arith.fptosi %460 : vector<1x128xf32> to vector<1x128xi32>
    %c6_i32_136 = arith.constant 6 : i32
    %462 = vector.broadcast %c6_i32_136 : i32 to vector<1x128xi32>
    %463 = arith.minsi %461, %462 : vector<1x128xi32>
    %464 = arith.sitofp %463 : vector<1x128xi32> to vector<1x128xf32>
    %465 = arith.subf %459, %464 : vector<1x128xf32>
    %cst_137 = arith.constant 1.000000e+00 : f32
    %466 = vector.broadcast %cst_137 : f32 to vector<1x128xf32>
    %467 = arith.subf %466, %431 : vector<1x128xf32>
    %468 = vector.shape_cast %22 : vector<8x1xi1> to vector<8x1xi1>
    %469 = vector.broadcast %468 : vector<8x1xi1> to vector<8x128xi1>
    %470 = vector.shape_cast %431 : vector<1x128xf32> to vector<1x128xf32>
    %471 = vector.broadcast %470 : vector<1x128xf32> to vector<8x128xf32>
    %472 = vector.shape_cast %467 : vector<1x128xf32> to vector<1x128xf32>
    %473 = vector.broadcast %472 : vector<1x128xf32> to vector<8x128xf32>
    %474 = arith.select %469, %471, %473 : vector<8x128xi1>, vector<8x128xf32>
    %cst_138 = arith.constant 1.000000e+00 : f32
    %475 = vector.broadcast %cst_138 : f32 to vector<1x128xf32>
    %476 = arith.subf %475, %448 : vector<1x128xf32>
    %477 = vector.shape_cast %24 : vector<8x1xi1> to vector<8x1xi1>
    %478 = vector.broadcast %477 : vector<8x1xi1> to vector<8x128xi1>
    %479 = vector.shape_cast %448 : vector<1x128xf32> to vector<1x128xf32>
    %480 = vector.broadcast %479 : vector<1x128xf32> to vector<8x128xf32>
    %481 = vector.shape_cast %476 : vector<1x128xf32> to vector<1x128xf32>
    %482 = vector.broadcast %481 : vector<1x128xf32> to vector<8x128xf32>
    %483 = arith.select %478, %480, %482 : vector<8x128xi1>, vector<8x128xf32>
    %cst_139 = arith.constant 1.000000e+00 : f32
    %484 = vector.broadcast %cst_139 : f32 to vector<1x128xf32>
    %485 = arith.subf %484, %465 : vector<1x128xf32>
    %486 = vector.shape_cast %26 : vector<8x1xi1> to vector<8x1xi1>
    %487 = vector.broadcast %486 : vector<8x1xi1> to vector<8x128xi1>
    %488 = vector.shape_cast %465 : vector<1x128xf32> to vector<1x128xf32>
    %489 = vector.broadcast %488 : vector<1x128xf32> to vector<8x128xf32>
    %490 = vector.shape_cast %485 : vector<1x128xf32> to vector<1x128xf32>
    %491 = vector.broadcast %490 : vector<1x128xf32> to vector<8x128xf32>
    %492 = arith.select %487, %489, %491 : vector<8x128xi1>, vector<8x128xf32>
    %493 = arith.mulf %492, %483 : vector<8x128xf32>
    %494 = arith.mulf %493, %474 : vector<8x128xf32>
    %c0_140 = arith.constant 0 : index
    %c384_141 = arith.constant 384 : index
    %495 = vector.load %arg5[%c0_140, %c384_141] : memref<8x1024xf32, #tpu.memory_space<vmem>>, vector<8x128xf32>
    tpu.vector_store %arg5[%c0_140, %c384_141], %494 {strides = array<i32>} : memref<8x1024xf32, #tpu.memory_space<vmem>>, vector<8x128xf32>,
    %c64_i32_142 = arith.constant 64 : i32
    %496 = vector.broadcast %c64_i32_142 : i32 to vector<1x128xi32>
    %497 = arith.muli %463, %496 : vector<1x128xi32>
    %c8_i32_143 = arith.constant 8 : i32
    %498 = vector.broadcast %c8_i32_143 : i32 to vector<1x128xi32>
    %499 = arith.muli %446, %498 : vector<1x128xi32>
    %500 = arith.addi %497, %499 : vector<1x128xi32>
    %501 = arith.addi %500, %429 : vector<1x128xi32>
    %502 = vector.broadcast %501 : vector<1x128xi32> to vector<8x128xi32>
    %503 = vector.broadcast %20 : vector<8x1xi32> to vector<8x128xi32>
    %504 = arith.addi %502, %503 : vector<8x128xi32>
    %c7_i32_144 = arith.constant 7 : i32
    %505 = vector.broadcast %c7_i32_144 : i32 to vector<8x128xi32>
    %506 = arith.shrsi %504, %505 : vector<8x128xi32>
    %c127_i32_145 = arith.constant 127 : i32
    %507 = vector.broadcast %c127_i32_145 : i32 to vector<8x128xi32>
    %508 = arith.andi %504, %507 : vector<8x128xi32>
    %509 = vector.shape_cast %508 : vector<8x128xi32> to vector<8x128x1xi32>
    %510 = vector.shape_cast %509 : vector<8x128x1xi32> to vector<8x128xi32>
    %511 = tpu.dynamic_gather %27[%510] in [1] : vector<8x128xi32>, vector<8x128xi32> -> vector<8x128xi32>
    %512 = vector.shape_cast %508 : vector<8x128xi32> to vector<8x128x1xi32>
    %513 = vector.shape_cast %512 : vector<8x128x1xi32> to vector<8x128xi32>
    %514 = tpu.dynamic_gather %28[%513] in [1] : vector<8x128xi32>, vector<8x128xi32> -> vector<8x128xi32>
    %c1_i32_146 = arith.constant 1 : i32
    %515 = vector.broadcast %c1_i32_146 : i32 to vector<8x128xi32>
    %516 = arith.cmpi eq, %506, %515 : vector<8x128xi32>
    %517 = arith.select %516, %514, %511 : vector<8x128xi1>, vector<8x128xi32>
    %518 = vector.shape_cast %508 : vector<8x128xi32> to vector<8x128x1xi32>
    %519 = vector.shape_cast %518 : vector<8x128x1xi32> to vector<8x128xi32>
    %520 = tpu.dynamic_gather %29[%519] in [1] : vector<8x128xi32>, vector<8x128xi32> -> vector<8x128xi32>
    %c2_i32_147 = arith.constant 2 : i32
    %521 = vector.broadcast %c2_i32_147 : i32 to vector<8x128xi32>
    %522 = arith.cmpi eq, %506, %521 : vector<8x128xi32>
    %523 = arith.select %522, %520, %517 : vector<8x128xi1>, vector<8x128xi32>
    %524 = vector.shape_cast %508 : vector<8x128xi32> to vector<8x128x1xi32>
    %525 = vector.shape_cast %524 : vector<8x128x1xi32> to vector<8x128xi32>
    %526 = tpu.dynamic_gather %30[%525] in [1] : vector<8x128xi32>, vector<8x128xi32> -> vector<8x128xi32>
    %c3_i32_148 = arith.constant 3 : i32
    %527 = vector.broadcast %c3_i32_148 : i32 to vector<8x128xi32>
    %528 = arith.cmpi eq, %506, %527 : vector<8x128xi32>
    %529 = arith.select %528, %526, %523 : vector<8x128xi1>, vector<8x128xi32>
    %c0_149 = arith.constant 0 : index
    %c384_150 = arith.constant 384 : index
    %530 = vector.load %arg4[%c0_149, %c384_150] : memref<8x1024xi32, #tpu.memory_space<vmem>>, vector<8x128xi32>
    tpu.vector_store %arg4[%c0_149, %c384_150], %529 {strides = array<i32>} : memref<8x1024xi32, #tpu.memory_space<vmem>>, vector<8x128xi32>,
    %c0_151 = arith.constant 0 : index
    %c512 = arith.constant 512 : index
    %531 = vector.load %arg1[%c0_151, %c512] : memref<3x1024xf32, #tpu.memory_space<vmem>>, vector<3x128xf32>
    %532 = vector.broadcast %1 : vector<3x1xf32> to vector<3x128xf32>
    %533 = arith.subf %531, %532 : vector<3x128xf32>
    %534 = vector.broadcast %3 : vector<3x1xf32> to vector<3x128xf32>
    %535 = arith.divf %533, %534 : vector<3x128xf32>
    %cst_152 = arith.constant 2.000000e+00 : f32
    %536 = vector.broadcast %cst_152 : f32 to vector<3x128xf32>
    %537 = arith.mulf %535, %536 : vector<3x128xf32>
    %cst_153 = arith.constant 1.000000e+00 : f32
    %538 = vector.broadcast %cst_153 : f32 to vector<3x128xf32>
    %539 = arith.subf %537, %538 : vector<3x128xf32>
    %540 = vector.extract_strided_slice %539 {offsets = [0, 0], sizes = [1, 128], strides = [1, 1]} : vector<3x128xf32> to vector<1x128xf32>
    %cst_154 = arith.constant 1.000000e+00 : f32
    %541 = vector.broadcast %cst_154 : f32 to vector<1x128xf32>
    %542 = arith.addf %540, %541 : vector<1x128xf32>
    %cst_155 = arith.constant 5.000000e-01 : f32
    %543 = vector.broadcast %cst_155 : f32 to vector<1x128xf32>
    %544 = arith.mulf %542, %543 : vector<1x128xf32>
    %cst_156 = arith.constant 7.000000e+00 : f32
    %545 = vector.broadcast %cst_156 : f32 to vector<1x128xf32>
    %546 = arith.mulf %544, %545 : vector<1x128xf32>
    %cst_157 = arith.constant 0.000000e+00 : f32
    %cst_158 = arith.constant 7.000000e+00 : f32
    %547 = vector.broadcast %cst_157 : f32 to vector<1x128xf32>
    %548 = arith.maximumf %547, %546 : vector<1x128xf32>
    %549 = vector.broadcast %cst_158 : f32 to vector<1x128xf32>
    %550 = arith.minimumf %549, %548 : vector<1x128xf32>
    %551 = math.floor %550 : vector<1x128xf32>
    %552 = arith.fptosi %551 : vector<1x128xf32> to vector<1x128xi32>
    %c6_i32_159 = arith.constant 6 : i32
    %553 = vector.broadcast %c6_i32_159 : i32 to vector<1x128xi32>
    %554 = arith.minsi %552, %553 : vector<1x128xi32>
    %555 = arith.sitofp %554 : vector<1x128xi32> to vector<1x128xf32>
    %556 = arith.subf %550, %555 : vector<1x128xf32>
    %557 = vector.extract_strided_slice %539 {offsets = [1, 0], sizes = [1, 128], strides = [1, 1]} : vector<3x128xf32> to vector<1x128xf32>
    %cst_160 = arith.constant 1.000000e+00 : f32
    %558 = vector.broadcast %cst_160 : f32 to vector<1x128xf32>
    %559 = arith.addf %557, %558 : vector<1x128xf32>
    %cst_161 = arith.constant 5.000000e-01 : f32
    %560 = vector.broadcast %cst_161 : f32 to vector<1x128xf32>
    %561 = arith.mulf %559, %560 : vector<1x128xf32>
    %cst_162 = arith.constant 7.000000e+00 : f32
    %562 = vector.broadcast %cst_162 : f32 to vector<1x128xf32>
    %563 = arith.mulf %561, %562 : vector<1x128xf32>
    %cst_163 = arith.constant 0.000000e+00 : f32
    %cst_164 = arith.constant 7.000000e+00 : f32
    %564 = vector.broadcast %cst_163 : f32 to vector<1x128xf32>
    %565 = arith.maximumf %564, %563 : vector<1x128xf32>
    %566 = vector.broadcast %cst_164 : f32 to vector<1x128xf32>
    %567 = arith.minimumf %566, %565 : vector<1x128xf32>
    %568 = math.floor %567 : vector<1x128xf32>
    %569 = arith.fptosi %568 : vector<1x128xf32> to vector<1x128xi32>
    %c6_i32_165 = arith.constant 6 : i32
    %570 = vector.broadcast %c6_i32_165 : i32 to vector<1x128xi32>
    %571 = arith.minsi %569, %570 : vector<1x128xi32>
    %572 = arith.sitofp %571 : vector<1x128xi32> to vector<1x128xf32>
    %573 = arith.subf %567, %572 : vector<1x128xf32>
    %574 = vector.extract_strided_slice %539 {offsets = [2, 0], sizes = [1, 128], strides = [1, 1]} : vector<3x128xf32> to vector<1x128xf32>
    %cst_166 = arith.constant 1.000000e+00 : f32
    %575 = vector.broadcast %cst_166 : f32 to vector<1x128xf32>
    %576 = arith.addf %574, %575 : vector<1x128xf32>
    %cst_167 = arith.constant 5.000000e-01 : f32
    %577 = vector.broadcast %cst_167 : f32 to vector<1x128xf32>
    %578 = arith.mulf %576, %577 : vector<1x128xf32>
    %cst_168 = arith.constant 7.000000e+00 : f32
    %579 = vector.broadcast %cst_168 : f32 to vector<1x128xf32>
    %580 = arith.mulf %578, %579 : vector<1x128xf32>
    %cst_169 = arith.constant 0.000000e+00 : f32
    %cst_170 = arith.constant 7.000000e+00 : f32
    %581 = vector.broadcast %cst_169 : f32 to vector<1x128xf32>
    %582 = arith.maximumf %581, %580 : vector<1x128xf32>
    %583 = vector.broadcast %cst_170 : f32 to vector<1x128xf32>
    %584 = arith.minimumf %583, %582 : vector<1x128xf32>
    %585 = math.floor %584 : vector<1x128xf32>
    %586 = arith.fptosi %585 : vector<1x128xf32> to vector<1x128xi32>
    %c6_i32_171 = arith.constant 6 : i32
    %587 = vector.broadcast %c6_i32_171 : i32 to vector<1x128xi32>
    %588 = arith.minsi %586, %587 : vector<1x128xi32>
    %589 = arith.sitofp %588 : vector<1x128xi32> to vector<1x128xf32>
    %590 = arith.subf %584, %589 : vector<1x128xf32>
    %cst_172 = arith.constant 1.000000e+00 : f32
    %591 = vector.broadcast %cst_172 : f32 to vector<1x128xf32>
    %592 = arith.subf %591, %556 : vector<1x128xf32>
    %593 = vector.shape_cast %22 : vector<8x1xi1> to vector<8x1xi1>
    %594 = vector.broadcast %593 : vector<8x1xi1> to vector<8x128xi1>
    %595 = vector.shape_cast %556 : vector<1x128xf32> to vector<1x128xf32>
    %596 = vector.broadcast %595 : vector<1x128xf32> to vector<8x128xf32>
    %597 = vector.shape_cast %592 : vector<1x128xf32> to vector<1x128xf32>
    %598 = vector.broadcast %597 : vector<1x128xf32> to vector<8x128xf32>
    %599 = arith.select %594, %596, %598 : vector<8x128xi1>, vector<8x128xf32>
    %cst_173 = arith.constant 1.000000e+00 : f32
    %600 = vector.broadcast %cst_173 : f32 to vector<1x128xf32>
    %601 = arith.subf %600, %573 : vector<1x128xf32>
    %602 = vector.shape_cast %24 : vector<8x1xi1> to vector<8x1xi1>
    %603 = vector.broadcast %602 : vector<8x1xi1> to vector<8x128xi1>
    %604 = vector.shape_cast %573 : vector<1x128xf32> to vector<1x128xf32>
    %605 = vector.broadcast %604 : vector<1x128xf32> to vector<8x128xf32>
    %606 = vector.shape_cast %601 : vector<1x128xf32> to vector<1x128xf32>
    %607 = vector.broadcast %606 : vector<1x128xf32> to vector<8x128xf32>
    %608 = arith.select %603, %605, %607 : vector<8x128xi1>, vector<8x128xf32>
    %cst_174 = arith.constant 1.000000e+00 : f32
    %609 = vector.broadcast %cst_174 : f32 to vector<1x128xf32>
    %610 = arith.subf %609, %590 : vector<1x128xf32>
    %611 = vector.shape_cast %26 : vector<8x1xi1> to vector<8x1xi1>
    %612 = vector.broadcast %611 : vector<8x1xi1> to vector<8x128xi1>
    %613 = vector.shape_cast %590 : vector<1x128xf32> to vector<1x128xf32>
    %614 = vector.broadcast %613 : vector<1x128xf32> to vector<8x128xf32>
    %615 = vector.shape_cast %610 : vector<1x128xf32> to vector<1x128xf32>
    %616 = vector.broadcast %615 : vector<1x128xf32> to vector<8x128xf32>
    %617 = arith.select %612, %614, %616 : vector<8x128xi1>, vector<8x128xf32>
    %618 = arith.mulf %617, %608 : vector<8x128xf32>
    %619 = arith.mulf %618, %599 : vector<8x128xf32>
    %c0_175 = arith.constant 0 : index
    %c512_176 = arith.constant 512 : index
    %620 = vector.load %arg5[%c0_175, %c512_176] : memref<8x1024xf32, #tpu.memory_space<vmem>>, vector<8x128xf32>
    tpu.vector_store %arg5[%c0_175, %c512_176], %619 {strides = array<i32>} : memref<8x1024xf32, #tpu.memory_space<vmem>>, vector<8x128xf32>,
    %c64_i32_177 = arith.constant 64 : i32
    %621 = vector.broadcast %c64_i32_177 : i32 to vector<1x128xi32>
    %622 = arith.muli %588, %621 : vector<1x128xi32>
    %c8_i32_178 = arith.constant 8 : i32
    %623 = vector.broadcast %c8_i32_178 : i32 to vector<1x128xi32>
    %624 = arith.muli %571, %623 : vector<1x128xi32>
    %625 = arith.addi %622, %624 : vector<1x128xi32>
    %626 = arith.addi %625, %554 : vector<1x128xi32>
    %627 = vector.broadcast %626 : vector<1x128xi32> to vector<8x128xi32>
    %628 = vector.broadcast %20 : vector<8x1xi32> to vector<8x128xi32>
    %629 = arith.addi %627, %628 : vector<8x128xi32>
    %c7_i32_179 = arith.constant 7 : i32
    %630 = vector.broadcast %c7_i32_179 : i32 to vector<8x128xi32>
    %631 = arith.shrsi %629, %630 : vector<8x128xi32>
    %c127_i32_180 = arith.constant 127 : i32
    %632 = vector.broadcast %c127_i32_180 : i32 to vector<8x128xi32>
    %633 = arith.andi %629, %632 : vector<8x128xi32>
    %634 = vector.shape_cast %633 : vector<8x128xi32> to vector<8x128x1xi32>
    %635 = vector.shape_cast %634 : vector<8x128x1xi32> to vector<8x128xi32>
    %636 = tpu.dynamic_gather %27[%635] in [1] : vector<8x128xi32>, vector<8x128xi32> -> vector<8x128xi32>
    %637 = vector.shape_cast %633 : vector<8x128xi32> to vector<8x128x1xi32>
    %638 = vector.shape_cast %637 : vector<8x128x1xi32> to vector<8x128xi32>
    %639 = tpu.dynamic_gather %28[%638] in [1] : vector<8x128xi32>, vector<8x128xi32> -> vector<8x128xi32>
    %c1_i32_181 = arith.constant 1 : i32
    %640 = vector.broadcast %c1_i32_181 : i32 to vector<8x128xi32>
    %641 = arith.cmpi eq, %631, %640 : vector<8x128xi32>
    %642 = arith.select %641, %639, %636 : vector<8x128xi1>, vector<8x128xi32>
    %643 = vector.shape_cast %633 : vector<8x128xi32> to vector<8x128x1xi32>
    %644 = vector.shape_cast %643 : vector<8x128x1xi32> to vector<8x128xi32>
    %645 = tpu.dynamic_gather %29[%644] in [1] : vector<8x128xi32>, vector<8x128xi32> -> vector<8x128xi32>
    %c2_i32_182 = arith.constant 2 : i32
    %646 = vector.broadcast %c2_i32_182 : i32 to vector<8x128xi32>
    %647 = arith.cmpi eq, %631, %646 : vector<8x128xi32>
    %648 = arith.select %647, %645, %642 : vector<8x128xi1>, vector<8x128xi32>
    %649 = vector.shape_cast %633 : vector<8x128xi32> to vector<8x128x1xi32>
    %650 = vector.shape_cast %649 : vector<8x128x1xi32> to vector<8x128xi32>
    %651 = tpu.dynamic_gather %30[%650] in [1] : vector<8x128xi32>, vector<8x128xi32> -> vector<8x128xi32>
    %c3_i32_183 = arith.constant 3 : i32
    %652 = vector.broadcast %c3_i32_183 : i32 to vector<8x128xi32>
    %653 = arith.cmpi eq, %631, %652 : vector<8x128xi32>
    %654 = arith.select %653, %651, %648 : vector<8x128xi1>, vector<8x128xi32>
    %c0_184 = arith.constant 0 : index
    %c512_185 = arith.constant 512 : index
    %655 = vector.load %arg4[%c0_184, %c512_185] : memref<8x1024xi32, #tpu.memory_space<vmem>>, vector<8x128xi32>
    tpu.vector_store %arg4[%c0_184, %c512_185], %654 {strides = array<i32>} : memref<8x1024xi32, #tpu.memory_space<vmem>>, vector<8x128xi32>,
    %c0_186 = arith.constant 0 : index
    %c640 = arith.constant 640 : index
    %656 = vector.load %arg1[%c0_186, %c640] : memref<3x1024xf32, #tpu.memory_space<vmem>>, vector<3x128xf32>
    %657 = vector.broadcast %1 : vector<3x1xf32> to vector<3x128xf32>
    %658 = arith.subf %656, %657 : vector<3x128xf32>
    %659 = vector.broadcast %3 : vector<3x1xf32> to vector<3x128xf32>
    %660 = arith.divf %658, %659 : vector<3x128xf32>
    %cst_187 = arith.constant 2.000000e+00 : f32
    %661 = vector.broadcast %cst_187 : f32 to vector<3x128xf32>
    %662 = arith.mulf %660, %661 : vector<3x128xf32>
    %cst_188 = arith.constant 1.000000e+00 : f32
    %663 = vector.broadcast %cst_188 : f32 to vector<3x128xf32>
    %664 = arith.subf %662, %663 : vector<3x128xf32>
    %665 = vector.extract_strided_slice %664 {offsets = [0, 0], sizes = [1, 128], strides = [1, 1]} : vector<3x128xf32> to vector<1x128xf32>
    %cst_189 = arith.constant 1.000000e+00 : f32
    %666 = vector.broadcast %cst_189 : f32 to vector<1x128xf32>
    %667 = arith.addf %665, %666 : vector<1x128xf32>
    %cst_190 = arith.constant 5.000000e-01 : f32
    %668 = vector.broadcast %cst_190 : f32 to vector<1x128xf32>
    %669 = arith.mulf %667, %668 : vector<1x128xf32>
    %cst_191 = arith.constant 7.000000e+00 : f32
    %670 = vector.broadcast %cst_191 : f32 to vector<1x128xf32>
    %671 = arith.mulf %669, %670 : vector<1x128xf32>
    %cst_192 = arith.constant 0.000000e+00 : f32
    %cst_193 = arith.constant 7.000000e+00 : f32
    %672 = vector.broadcast %cst_192 : f32 to vector<1x128xf32>
    %673 = arith.maximumf %672, %671 : vector<1x128xf32>
    %674 = vector.broadcast %cst_193 : f32 to vector<1x128xf32>
    %675 = arith.minimumf %674, %673 : vector<1x128xf32>
    %676 = math.floor %675 : vector<1x128xf32>
    %677 = arith.fptosi %676 : vector<1x128xf32> to vector<1x128xi32>
    %c6_i32_194 = arith.constant 6 : i32
    %678 = vector.broadcast %c6_i32_194 : i32 to vector<1x128xi32>
    %679 = arith.minsi %677, %678 : vector<1x128xi32>
    %680 = arith.sitofp %679 : vector<1x128xi32> to vector<1x128xf32>
    %681 = arith.subf %675, %680 : vector<1x128xf32>
    %682 = vector.extract_strided_slice %664 {offsets = [1, 0], sizes = [1, 128], strides = [1, 1]} : vector<3x128xf32> to vector<1x128xf32>
    %cst_195 = arith.constant 1.000000e+00 : f32
    %683 = vector.broadcast %cst_195 : f32 to vector<1x128xf32>
    %684 = arith.addf %682, %683 : vector<1x128xf32>
    %cst_196 = arith.constant 5.000000e-01 : f32
    %685 = vector.broadcast %cst_196 : f32 to vector<1x128xf32>
    %686 = arith.mulf %684, %685 : vector<1x128xf32>
    %cst_197 = arith.constant 7.000000e+00 : f32
    %687 = vector.broadcast %cst_197 : f32 to vector<1x128xf32>
    %688 = arith.mulf %686, %687 : vector<1x128xf32>
    %cst_198 = arith.constant 0.000000e+00 : f32
    %cst_199 = arith.constant 7.000000e+00 : f32
    %689 = vector.broadcast %cst_198 : f32 to vector<1x128xf32>
    %690 = arith.maximumf %689, %688 : vector<1x128xf32>
    %691 = vector.broadcast %cst_199 : f32 to vector<1x128xf32>
    %692 = arith.minimumf %691, %690 : vector<1x128xf32>
    %693 = math.floor %692 : vector<1x128xf32>
    %694 = arith.fptosi %693 : vector<1x128xf32> to vector<1x128xi32>
    %c6_i32_200 = arith.constant 6 : i32
    %695 = vector.broadcast %c6_i32_200 : i32 to vector<1x128xi32>
    %696 = arith.minsi %694, %695 : vector<1x128xi32>
    %697 = arith.sitofp %696 : vector<1x128xi32> to vector<1x128xf32>
    %698 = arith.subf %692, %697 : vector<1x128xf32>
    %699 = vector.extract_strided_slice %664 {offsets = [2, 0], sizes = [1, 128], strides = [1, 1]} : vector<3x128xf32> to vector<1x128xf32>
    %cst_201 = arith.constant 1.000000e+00 : f32
    %700 = vector.broadcast %cst_201 : f32 to vector<1x128xf32>
    %701 = arith.addf %699, %700 : vector<1x128xf32>
    %cst_202 = arith.constant 5.000000e-01 : f32
    %702 = vector.broadcast %cst_202 : f32 to vector<1x128xf32>
    %703 = arith.mulf %701, %702 : vector<1x128xf32>
    %cst_203 = arith.constant 7.000000e+00 : f32
    %704 = vector.broadcast %cst_203 : f32 to vector<1x128xf32>
    %705 = arith.mulf %703, %704 : vector<1x128xf32>
    %cst_204 = arith.constant 0.000000e+00 : f32
    %cst_205 = arith.constant 7.000000e+00 : f32
    %706 = vector.broadcast %cst_204 : f32 to vector<1x128xf32>
    %707 = arith.maximumf %706, %705 : vector<1x128xf32>
    %708 = vector.broadcast %cst_205 : f32 to vector<1x128xf32>
    %709 = arith.minimumf %708, %707 : vector<1x128xf32>
    %710 = math.floor %709 : vector<1x128xf32>
    %711 = arith.fptosi %710 : vector<1x128xf32> to vector<1x128xi32>
    %c6_i32_206 = arith.constant 6 : i32
    %712 = vector.broadcast %c6_i32_206 : i32 to vector<1x128xi32>
    %713 = arith.minsi %711, %712 : vector<1x128xi32>
    %714 = arith.sitofp %713 : vector<1x128xi32> to vector<1x128xf32>
    %715 = arith.subf %709, %714 : vector<1x128xf32>
    %cst_207 = arith.constant 1.000000e+00 : f32
    %716 = vector.broadcast %cst_207 : f32 to vector<1x128xf32>
    %717 = arith.subf %716, %681 : vector<1x128xf32>
    %718 = vector.shape_cast %22 : vector<8x1xi1> to vector<8x1xi1>
    %719 = vector.broadcast %718 : vector<8x1xi1> to vector<8x128xi1>
    %720 = vector.shape_cast %681 : vector<1x128xf32> to vector<1x128xf32>
    %721 = vector.broadcast %720 : vector<1x128xf32> to vector<8x128xf32>
    %722 = vector.shape_cast %717 : vector<1x128xf32> to vector<1x128xf32>
    %723 = vector.broadcast %722 : vector<1x128xf32> to vector<8x128xf32>
    %724 = arith.select %719, %721, %723 : vector<8x128xi1>, vector<8x128xf32>
    %cst_208 = arith.constant 1.000000e+00 : f32
    %725 = vector.broadcast %cst_208 : f32 to vector<1x128xf32>
    %726 = arith.subf %725, %698 : vector<1x128xf32>
    %727 = vector.shape_cast %24 : vector<8x1xi1> to vector<8x1xi1>
    %728 = vector.broadcast %727 : vector<8x1xi1> to vector<8x128xi1>
    %729 = vector.shape_cast %698 : vector<1x128xf32> to vector<1x128xf32>
    %730 = vector.broadcast %729 : vector<1x128xf32> to vector<8x128xf32>
    %731 = vector.shape_cast %726 : vector<1x128xf32> to vector<1x128xf32>
    %732 = vector.broadcast %731 : vector<1x128xf32> to vector<8x128xf32>
    %733 = arith.select %728, %730, %732 : vector<8x128xi1>, vector<8x128xf32>
    %cst_209 = arith.constant 1.000000e+00 : f32
    %734 = vector.broadcast %cst_209 : f32 to vector<1x128xf32>
    %735 = arith.subf %734, %715 : vector<1x128xf32>
    %736 = vector.shape_cast %26 : vector<8x1xi1> to vector<8x1xi1>
    %737 = vector.broadcast %736 : vector<8x1xi1> to vector<8x128xi1>
    %738 = vector.shape_cast %715 : vector<1x128xf32> to vector<1x128xf32>
    %739 = vector.broadcast %738 : vector<1x128xf32> to vector<8x128xf32>
    %740 = vector.shape_cast %735 : vector<1x128xf32> to vector<1x128xf32>
    %741 = vector.broadcast %740 : vector<1x128xf32> to vector<8x128xf32>
    %742 = arith.select %737, %739, %741 : vector<8x128xi1>, vector<8x128xf32>
    %743 = arith.mulf %742, %733 : vector<8x128xf32>
    %744 = arith.mulf %743, %724 : vector<8x128xf32>
    %c0_210 = arith.constant 0 : index
    %c640_211 = arith.constant 640 : index
    %745 = vector.load %arg5[%c0_210, %c640_211] : memref<8x1024xf32, #tpu.memory_space<vmem>>, vector<8x128xf32>
    tpu.vector_store %arg5[%c0_210, %c640_211], %744 {strides = array<i32>} : memref<8x1024xf32, #tpu.memory_space<vmem>>, vector<8x128xf32>,
    %c64_i32_212 = arith.constant 64 : i32
    %746 = vector.broadcast %c64_i32_212 : i32 to vector<1x128xi32>
    %747 = arith.muli %713, %746 : vector<1x128xi32>
    %c8_i32_213 = arith.constant 8 : i32
    %748 = vector.broadcast %c8_i32_213 : i32 to vector<1x128xi32>
    %749 = arith.muli %696, %748 : vector<1x128xi32>
    %750 = arith.addi %747, %749 : vector<1x128xi32>
    %751 = arith.addi %750, %679 : vector<1x128xi32>
    %752 = vector.broadcast %751 : vector<1x128xi32> to vector<8x128xi32>
    %753 = vector.broadcast %20 : vector<8x1xi32> to vector<8x128xi32>
    %754 = arith.addi %752, %753 : vector<8x128xi32>
    %c7_i32_214 = arith.constant 7 : i32
    %755 = vector.broadcast %c7_i32_214 : i32 to vector<8x128xi32>
    %756 = arith.shrsi %754, %755 : vector<8x128xi32>
    %c127_i32_215 = arith.constant 127 : i32
    %757 = vector.broadcast %c127_i32_215 : i32 to vector<8x128xi32>
    %758 = arith.andi %754, %757 : vector<8x128xi32>
    %759 = vector.shape_cast %758 : vector<8x128xi32> to vector<8x128x1xi32>
    %760 = vector.shape_cast %759 : vector<8x128x1xi32> to vector<8x128xi32>
    %761 = tpu.dynamic_gather %27[%760] in [1] : vector<8x128xi32>, vector<8x128xi32> -> vector<8x128xi32>
    %762 = vector.shape_cast %758 : vector<8x128xi32> to vector<8x128x1xi32>
    %763 = vector.shape_cast %762 : vector<8x128x1xi32> to vector<8x128xi32>
    %764 = tpu.dynamic_gather %28[%763] in [1] : vector<8x128xi32>, vector<8x128xi32> -> vector<8x128xi32>
    %c1_i32_216 = arith.constant 1 : i32
    %765 = vector.broadcast %c1_i32_216 : i32 to vector<8x128xi32>
    %766 = arith.cmpi eq, %756, %765 : vector<8x128xi32>
    %767 = arith.select %766, %764, %761 : vector<8x128xi1>, vector<8x128xi32>
    %768 = vector.shape_cast %758 : vector<8x128xi32> to vector<8x128x1xi32>
    %769 = vector.shape_cast %768 : vector<8x128x1xi32> to vector<8x128xi32>
    %770 = tpu.dynamic_gather %29[%769] in [1] : vector<8x128xi32>, vector<8x128xi32> -> vector<8x128xi32>
    %c2_i32_217 = arith.constant 2 : i32
    %771 = vector.broadcast %c2_i32_217 : i32 to vector<8x128xi32>
    %772 = arith.cmpi eq, %756, %771 : vector<8x128xi32>
    %773 = arith.select %772, %770, %767 : vector<8x128xi1>, vector<8x128xi32>
    %774 = vector.shape_cast %758 : vector<8x128xi32> to vector<8x128x1xi32>
    %775 = vector.shape_cast %774 : vector<8x128x1xi32> to vector<8x128xi32>
    %776 = tpu.dynamic_gather %30[%775] in [1] : vector<8x128xi32>, vector<8x128xi32> -> vector<8x128xi32>
    %c3_i32_218 = arith.constant 3 : i32
    %777 = vector.broadcast %c3_i32_218 : i32 to vector<8x128xi32>
    %778 = arith.cmpi eq, %756, %777 : vector<8x128xi32>
    %779 = arith.select %778, %776, %773 : vector<8x128xi1>, vector<8x128xi32>
    %c0_219 = arith.constant 0 : index
    %c640_220 = arith.constant 640 : index
    %780 = vector.load %arg4[%c0_219, %c640_220] : memref<8x1024xi32, #tpu.memory_space<vmem>>, vector<8x128xi32>
    tpu.vector_store %arg4[%c0_219, %c640_220], %779 {strides = array<i32>} : memref<8x1024xi32, #tpu.memory_space<vmem>>, vector<8x128xi32>,
    %c0_221 = arith.constant 0 : index
    %c768 = arith.constant 768 : index
    %781 = vector.load %arg1[%c0_221, %c768] : memref<3x1024xf32, #tpu.memory_space<vmem>>, vector<3x128xf32>
    %782 = vector.broadcast %1 : vector<3x1xf32> to vector<3x128xf32>
    %783 = arith.subf %781, %782 : vector<3x128xf32>
    %784 = vector.broadcast %3 : vector<3x1xf32> to vector<3x128xf32>
    %785 = arith.divf %783, %784 : vector<3x128xf32>
    %cst_222 = arith.constant 2.000000e+00 : f32
    %786 = vector.broadcast %cst_222 : f32 to vector<3x128xf32>
    %787 = arith.mulf %785, %786 : vector<3x128xf32>
    %cst_223 = arith.constant 1.000000e+00 : f32
    %788 = vector.broadcast %cst_223 : f32 to vector<3x128xf32>
    %789 = arith.subf %787, %788 : vector<3x128xf32>
    %790 = vector.extract_strided_slice %789 {offsets = [0, 0], sizes = [1, 128], strides = [1, 1]} : vector<3x128xf32> to vector<1x128xf32>
    %cst_224 = arith.constant 1.000000e+00 : f32
    %791 = vector.broadcast %cst_224 : f32 to vector<1x128xf32>
    %792 = arith.addf %790, %791 : vector<1x128xf32>
    %cst_225 = arith.constant 5.000000e-01 : f32
    %793 = vector.broadcast %cst_225 : f32 to vector<1x128xf32>
    %794 = arith.mulf %792, %793 : vector<1x128xf32>
    %cst_226 = arith.constant 7.000000e+00 : f32
    %795 = vector.broadcast %cst_226 : f32 to vector<1x128xf32>
    %796 = arith.mulf %794, %795 : vector<1x128xf32>
    %cst_227 = arith.constant 0.000000e+00 : f32
    %cst_228 = arith.constant 7.000000e+00 : f32
    %797 = vector.broadcast %cst_227 : f32 to vector<1x128xf32>
    %798 = arith.maximumf %797, %796 : vector<1x128xf32>
    %799 = vector.broadcast %cst_228 : f32 to vector<1x128xf32>
    %800 = arith.minimumf %799, %798 : vector<1x128xf32>
    %801 = math.floor %800 : vector<1x128xf32>
    %802 = arith.fptosi %801 : vector<1x128xf32> to vector<1x128xi32>
    %c6_i32_229 = arith.constant 6 : i32
    %803 = vector.broadcast %c6_i32_229 : i32 to vector<1x128xi32>
    %804 = arith.minsi %802, %803 : vector<1x128xi32>
    %805 = arith.sitofp %804 : vector<1x128xi32> to vector<1x128xf32>
    %806 = arith.subf %800, %805 : vector<1x128xf32>
    %807 = vector.extract_strided_slice %789 {offsets = [1, 0], sizes = [1, 128], strides = [1, 1]} : vector<3x128xf32> to vector<1x128xf32>
    %cst_230 = arith.constant 1.000000e+00 : f32
    %808 = vector.broadcast %cst_230 : f32 to vector<1x128xf32>
    %809 = arith.addf %807, %808 : vector<1x128xf32>
    %cst_231 = arith.constant 5.000000e-01 : f32
    %810 = vector.broadcast %cst_231 : f32 to vector<1x128xf32>
    %811 = arith.mulf %809, %810 : vector<1x128xf32>
    %cst_232 = arith.constant 7.000000e+00 : f32
    %812 = vector.broadcast %cst_232 : f32 to vector<1x128xf32>
    %813 = arith.mulf %811, %812 : vector<1x128xf32>
    %cst_233 = arith.constant 0.000000e+00 : f32
    %cst_234 = arith.constant 7.000000e+00 : f32
    %814 = vector.broadcast %cst_233 : f32 to vector<1x128xf32>
    %815 = arith.maximumf %814, %813 : vector<1x128xf32>
    %816 = vector.broadcast %cst_234 : f32 to vector<1x128xf32>
    %817 = arith.minimumf %816, %815 : vector<1x128xf32>
    %818 = math.floor %817 : vector<1x128xf32>
    %819 = arith.fptosi %818 : vector<1x128xf32> to vector<1x128xi32>
    %c6_i32_235 = arith.constant 6 : i32
    %820 = vector.broadcast %c6_i32_235 : i32 to vector<1x128xi32>
    %821 = arith.minsi %819, %820 : vector<1x128xi32>
    %822 = arith.sitofp %821 : vector<1x128xi32> to vector<1x128xf32>
    %823 = arith.subf %817, %822 : vector<1x128xf32>
    %824 = vector.extract_strided_slice %789 {offsets = [2, 0], sizes = [1, 128], strides = [1, 1]} : vector<3x128xf32> to vector<1x128xf32>
    %cst_236 = arith.constant 1.000000e+00 : f32
    %825 = vector.broadcast %cst_236 : f32 to vector<1x128xf32>
    %826 = arith.addf %824, %825 : vector<1x128xf32>
    %cst_237 = arith.constant 5.000000e-01 : f32
    %827 = vector.broadcast %cst_237 : f32 to vector<1x128xf32>
    %828 = arith.mulf %826, %827 : vector<1x128xf32>
    %cst_238 = arith.constant 7.000000e+00 : f32
    %829 = vector.broadcast %cst_238 : f32 to vector<1x128xf32>
    %830 = arith.mulf %828, %829 : vector<1x128xf32>
    %cst_239 = arith.constant 0.000000e+00 : f32
    %cst_240 = arith.constant 7.000000e+00 : f32
    %831 = vector.broadcast %cst_239 : f32 to vector<1x128xf32>
    %832 = arith.maximumf %831, %830 : vector<1x128xf32>
    %833 = vector.broadcast %cst_240 : f32 to vector<1x128xf32>
    %834 = arith.minimumf %833, %832 : vector<1x128xf32>
    %835 = math.floor %834 : vector<1x128xf32>
    %836 = arith.fptosi %835 : vector<1x128xf32> to vector<1x128xi32>
    %c6_i32_241 = arith.constant 6 : i32
    %837 = vector.broadcast %c6_i32_241 : i32 to vector<1x128xi32>
    %838 = arith.minsi %836, %837 : vector<1x128xi32>
    %839 = arith.sitofp %838 : vector<1x128xi32> to vector<1x128xf32>
    %840 = arith.subf %834, %839 : vector<1x128xf32>
    %cst_242 = arith.constant 1.000000e+00 : f32
    %841 = vector.broadcast %cst_242 : f32 to vector<1x128xf32>
    %842 = arith.subf %841, %806 : vector<1x128xf32>
    %843 = vector.shape_cast %22 : vector<8x1xi1> to vector<8x1xi1>
    %844 = vector.broadcast %843 : vector<8x1xi1> to vector<8x128xi1>
    %845 = vector.shape_cast %806 : vector<1x128xf32> to vector<1x128xf32>
    %846 = vector.broadcast %845 : vector<1x128xf32> to vector<8x128xf32>
    %847 = vector.shape_cast %842 : vector<1x128xf32> to vector<1x128xf32>
    %848 = vector.broadcast %847 : vector<1x128xf32> to vector<8x128xf32>
    %849 = arith.select %844, %846, %848 : vector<8x128xi1>, vector<8x128xf32>
    %cst_243 = arith.constant 1.000000e+00 : f32
    %850 = vector.broadcast %cst_243 : f32 to vector<1x128xf32>
    %851 = arith.subf %850, %823 : vector<1x128xf32>
    %852 = vector.shape_cast %24 : vector<8x1xi1> to vector<8x1xi1>
    %853 = vector.broadcast %852 : vector<8x1xi1> to vector<8x128xi1>
    %854 = vector.shape_cast %823 : vector<1x128xf32> to vector<1x128xf32>
    %855 = vector.broadcast %854 : vector<1x128xf32> to vector<8x128xf32>
    %856 = vector.shape_cast %851 : vector<1x128xf32> to vector<1x128xf32>
    %857 = vector.broadcast %856 : vector<1x128xf32> to vector<8x128xf32>
    %858 = arith.select %853, %855, %857 : vector<8x128xi1>, vector<8x128xf32>
    %cst_244 = arith.constant 1.000000e+00 : f32
    %859 = vector.broadcast %cst_244 : f32 to vector<1x128xf32>
    %860 = arith.subf %859, %840 : vector<1x128xf32>
    %861 = vector.shape_cast %26 : vector<8x1xi1> to vector<8x1xi1>
    %862 = vector.broadcast %861 : vector<8x1xi1> to vector<8x128xi1>
    %863 = vector.shape_cast %840 : vector<1x128xf32> to vector<1x128xf32>
    %864 = vector.broadcast %863 : vector<1x128xf32> to vector<8x128xf32>
    %865 = vector.shape_cast %860 : vector<1x128xf32> to vector<1x128xf32>
    %866 = vector.broadcast %865 : vector<1x128xf32> to vector<8x128xf32>
    %867 = arith.select %862, %864, %866 : vector<8x128xi1>, vector<8x128xf32>
    %868 = arith.mulf %867, %858 : vector<8x128xf32>
    %869 = arith.mulf %868, %849 : vector<8x128xf32>
    %c0_245 = arith.constant 0 : index
    %c768_246 = arith.constant 768 : index
    %870 = vector.load %arg5[%c0_245, %c768_246] : memref<8x1024xf32, #tpu.memory_space<vmem>>, vector<8x128xf32>
    tpu.vector_store %arg5[%c0_245, %c768_246], %869 {strides = array<i32>} : memref<8x1024xf32, #tpu.memory_space<vmem>>, vector<8x128xf32>,
    %c64_i32_247 = arith.constant 64 : i32
    %871 = vector.broadcast %c64_i32_247 : i32 to vector<1x128xi32>
    %872 = arith.muli %838, %871 : vector<1x128xi32>
    %c8_i32_248 = arith.constant 8 : i32
    %873 = vector.broadcast %c8_i32_248 : i32 to vector<1x128xi32>
    %874 = arith.muli %821, %873 : vector<1x128xi32>
    %875 = arith.addi %872, %874 : vector<1x128xi32>
    %876 = arith.addi %875, %804 : vector<1x128xi32>
    %877 = vector.broadcast %876 : vector<1x128xi32> to vector<8x128xi32>
    %878 = vector.broadcast %20 : vector<8x1xi32> to vector<8x128xi32>
    %879 = arith.addi %877, %878 : vector<8x128xi32>
    %c7_i32_249 = arith.constant 7 : i32
    %880 = vector.broadcast %c7_i32_249 : i32 to vector<8x128xi32>
    %881 = arith.shrsi %879, %880 : vector<8x128xi32>
    %c127_i32_250 = arith.constant 127 : i32
    %882 = vector.broadcast %c127_i32_250 : i32 to vector<8x128xi32>
    %883 = arith.andi %879, %882 : vector<8x128xi32>
    %884 = vector.shape_cast %883 : vector<8x128xi32> to vector<8x128x1xi32>
    %885 = vector.shape_cast %884 : vector<8x128x1xi32> to vector<8x128xi32>
    %886 = tpu.dynamic_gather %27[%885] in [1] : vector<8x128xi32>, vector<8x128xi32> -> vector<8x128xi32>
    %887 = vector.shape_cast %883 : vector<8x128xi32> to vector<8x128x1xi32>
    %888 = vector.shape_cast %887 : vector<8x128x1xi32> to vector<8x128xi32>
    %889 = tpu.dynamic_gather %28[%888] in [1] : vector<8x128xi32>, vector<8x128xi32> -> vector<8x128xi32>
    %c1_i32_251 = arith.constant 1 : i32
    %890 = vector.broadcast %c1_i32_251 : i32 to vector<8x128xi32>
    %891 = arith.cmpi eq, %881, %890 : vector<8x128xi32>
    %892 = arith.select %891, %889, %886 : vector<8x128xi1>, vector<8x128xi32>
    %893 = vector.shape_cast %883 : vector<8x128xi32> to vector<8x128x1xi32>
    %894 = vector.shape_cast %893 : vector<8x128x1xi32> to vector<8x128xi32>
    %895 = tpu.dynamic_gather %29[%894] in [1] : vector<8x128xi32>, vector<8x128xi32> -> vector<8x128xi32>
    %c2_i32_252 = arith.constant 2 : i32
    %896 = vector.broadcast %c2_i32_252 : i32 to vector<8x128xi32>
    %897 = arith.cmpi eq, %881, %896 : vector<8x128xi32>
    %898 = arith.select %897, %895, %892 : vector<8x128xi1>, vector<8x128xi32>
    %899 = vector.shape_cast %883 : vector<8x128xi32> to vector<8x128x1xi32>
    %900 = vector.shape_cast %899 : vector<8x128x1xi32> to vector<8x128xi32>
    %901 = tpu.dynamic_gather %30[%900] in [1] : vector<8x128xi32>, vector<8x128xi32> -> vector<8x128xi32>
    %c3_i32_253 = arith.constant 3 : i32
    %902 = vector.broadcast %c3_i32_253 : i32 to vector<8x128xi32>
    %903 = arith.cmpi eq, %881, %902 : vector<8x128xi32>
    %904 = arith.select %903, %901, %898 : vector<8x128xi1>, vector<8x128xi32>
    %c0_254 = arith.constant 0 : index
    %c768_255 = arith.constant 768 : index
    %905 = vector.load %arg4[%c0_254, %c768_255] : memref<8x1024xi32, #tpu.memory_space<vmem>>, vector<8x128xi32>
    tpu.vector_store %arg4[%c0_254, %c768_255], %904 {strides = array<i32>} : memref<8x1024xi32, #tpu.memory_space<vmem>>, vector<8x128xi32>,
    %c0_256 = arith.constant 0 : index
    %c896 = arith.constant 896 : index
    %906 = vector.load %arg1[%c0_256, %c896] : memref<3x1024xf32, #tpu.memory_space<vmem>>, vector<3x128xf32>
    %907 = vector.broadcast %1 : vector<3x1xf32> to vector<3x128xf32>
    %908 = arith.subf %906, %907 : vector<3x128xf32>
    %909 = vector.broadcast %3 : vector<3x1xf32> to vector<3x128xf32>
    %910 = arith.divf %908, %909 : vector<3x128xf32>
    %cst_257 = arith.constant 2.000000e+00 : f32
    %911 = vector.broadcast %cst_257 : f32 to vector<3x128xf32>
    %912 = arith.mulf %910, %911 : vector<3x128xf32>
    %cst_258 = arith.constant 1.000000e+00 : f32
    %913 = vector.broadcast %cst_258 : f32 to vector<3x128xf32>
    %914 = arith.subf %912, %913 : vector<3x128xf32>
    %915 = vector.extract_strided_slice %914 {offsets = [0, 0], sizes = [1, 128], strides = [1, 1]} : vector<3x128xf32> to vector<1x128xf32>
    %cst_259 = arith.constant 1.000000e+00 : f32
    %916 = vector.broadcast %cst_259 : f32 to vector<1x128xf32>
    %917 = arith.addf %915, %916 : vector<1x128xf32>
    %cst_260 = arith.constant 5.000000e-01 : f32
    %918 = vector.broadcast %cst_260 : f32 to vector<1x128xf32>
    %919 = arith.mulf %917, %918 : vector<1x128xf32>
    %cst_261 = arith.constant 7.000000e+00 : f32
    %920 = vector.broadcast %cst_261 : f32 to vector<1x128xf32>
    %921 = arith.mulf %919, %920 : vector<1x128xf32>
    %cst_262 = arith.constant 0.000000e+00 : f32
    %cst_263 = arith.constant 7.000000e+00 : f32
    %922 = vector.broadcast %cst_262 : f32 to vector<1x128xf32>
    %923 = arith.maximumf %922, %921 : vector<1x128xf32>
    %924 = vector.broadcast %cst_263 : f32 to vector<1x128xf32>
    %925 = arith.minimumf %924, %923 : vector<1x128xf32>
    %926 = math.floor %925 : vector<1x128xf32>
    %927 = arith.fptosi %926 : vector<1x128xf32> to vector<1x128xi32>
    %c6_i32_264 = arith.constant 6 : i32
    %928 = vector.broadcast %c6_i32_264 : i32 to vector<1x128xi32>
    %929 = arith.minsi %927, %928 : vector<1x128xi32>
    %930 = arith.sitofp %929 : vector<1x128xi32> to vector<1x128xf32>
    %931 = arith.subf %925, %930 : vector<1x128xf32>
    %932 = vector.extract_strided_slice %914 {offsets = [1, 0], sizes = [1, 128], strides = [1, 1]} : vector<3x128xf32> to vector<1x128xf32>
    %cst_265 = arith.constant 1.000000e+00 : f32
    %933 = vector.broadcast %cst_265 : f32 to vector<1x128xf32>
    %934 = arith.addf %932, %933 : vector<1x128xf32>
    %cst_266 = arith.constant 5.000000e-01 : f32
    %935 = vector.broadcast %cst_266 : f32 to vector<1x128xf32>
    %936 = arith.mulf %934, %935 : vector<1x128xf32>
    %cst_267 = arith.constant 7.000000e+00 : f32
    %937 = vector.broadcast %cst_267 : f32 to vector<1x128xf32>
    %938 = arith.mulf %936, %937 : vector<1x128xf32>
    %cst_268 = arith.constant 0.000000e+00 : f32
    %cst_269 = arith.constant 7.000000e+00 : f32
    %939 = vector.broadcast %cst_268 : f32 to vector<1x128xf32>
    %940 = arith.maximumf %939, %938 : vector<1x128xf32>
    %941 = vector.broadcast %cst_269 : f32 to vector<1x128xf32>
    %942 = arith.minimumf %941, %940 : vector<1x128xf32>
    %943 = math.floor %942 : vector<1x128xf32>
    %944 = arith.fptosi %943 : vector<1x128xf32> to vector<1x128xi32>
    %c6_i32_270 = arith.constant 6 : i32
    %945 = vector.broadcast %c6_i32_270 : i32 to vector<1x128xi32>
    %946 = arith.minsi %944, %945 : vector<1x128xi32>
    %947 = arith.sitofp %946 : vector<1x128xi32> to vector<1x128xf32>
    %948 = arith.subf %942, %947 : vector<1x128xf32>
    %949 = vector.extract_strided_slice %914 {offsets = [2, 0], sizes = [1, 128], strides = [1, 1]} : vector<3x128xf32> to vector<1x128xf32>
    %cst_271 = arith.constant 1.000000e+00 : f32
    %950 = vector.broadcast %cst_271 : f32 to vector<1x128xf32>
    %951 = arith.addf %949, %950 : vector<1x128xf32>
    %cst_272 = arith.constant 5.000000e-01 : f32
    %952 = vector.broadcast %cst_272 : f32 to vector<1x128xf32>
    %953 = arith.mulf %951, %952 : vector<1x128xf32>
    %cst_273 = arith.constant 7.000000e+00 : f32
    %954 = vector.broadcast %cst_273 : f32 to vector<1x128xf32>
    %955 = arith.mulf %953, %954 : vector<1x128xf32>
    %cst_274 = arith.constant 0.000000e+00 : f32
    %cst_275 = arith.constant 7.000000e+00 : f32
    %956 = vector.broadcast %cst_274 : f32 to vector<1x128xf32>
    %957 = arith.maximumf %956, %955 : vector<1x128xf32>
    %958 = vector.broadcast %cst_275 : f32 to vector<1x128xf32>
    %959 = arith.minimumf %958, %957 : vector<1x128xf32>
    %960 = math.floor %959 : vector<1x128xf32>
    %961 = arith.fptosi %960 : vector<1x128xf32> to vector<1x128xi32>
    %c6_i32_276 = arith.constant 6 : i32
    %962 = vector.broadcast %c6_i32_276 : i32 to vector<1x128xi32>
    %963 = arith.minsi %961, %962 : vector<1x128xi32>
    %964 = arith.sitofp %963 : vector<1x128xi32> to vector<1x128xf32>
    %965 = arith.subf %959, %964 : vector<1x128xf32>
    %cst_277 = arith.constant 1.000000e+00 : f32
    %966 = vector.broadcast %cst_277 : f32 to vector<1x128xf32>
    %967 = arith.subf %966, %931 : vector<1x128xf32>
    %968 = vector.shape_cast %22 : vector<8x1xi1> to vector<8x1xi1>
    %969 = vector.broadcast %968 : vector<8x1xi1> to vector<8x128xi1>
    %970 = vector.shape_cast %931 : vector<1x128xf32> to vector<1x128xf32>
    %971 = vector.broadcast %970 : vector<1x128xf32> to vector<8x128xf32>
    %972 = vector.shape_cast %967 : vector<1x128xf32> to vector<1x128xf32>
    %973 = vector.broadcast %972 : vector<1x128xf32> to vector<8x128xf32>
    %974 = arith.select %969, %971, %973 : vector<8x128xi1>, vector<8x128xf32>
    %cst_278 = arith.constant 1.000000e+00 : f32
    %975 = vector.broadcast %cst_278 : f32 to vector<1x128xf32>
    %976 = arith.subf %975, %948 : vector<1x128xf32>
    %977 = vector.shape_cast %24 : vector<8x1xi1> to vector<8x1xi1>
    %978 = vector.broadcast %977 : vector<8x1xi1> to vector<8x128xi1>
    %979 = vector.shape_cast %948 : vector<1x128xf32> to vector<1x128xf32>
    %980 = vector.broadcast %979 : vector<1x128xf32> to vector<8x128xf32>
    %981 = vector.shape_cast %976 : vector<1x128xf32> to vector<1x128xf32>
    %982 = vector.broadcast %981 : vector<1x128xf32> to vector<8x128xf32>
    %983 = arith.select %978, %980, %982 : vector<8x128xi1>, vector<8x128xf32>
    %cst_279 = arith.constant 1.000000e+00 : f32
    %984 = vector.broadcast %cst_279 : f32 to vector<1x128xf32>
    %985 = arith.subf %984, %965 : vector<1x128xf32>
    %986 = vector.shape_cast %26 : vector<8x1xi1> to vector<8x1xi1>
    %987 = vector.broadcast %986 : vector<8x1xi1> to vector<8x128xi1>
    %988 = vector.shape_cast %965 : vector<1x128xf32> to vector<1x128xf32>
    %989 = vector.broadcast %988 : vector<1x128xf32> to vector<8x128xf32>
    %990 = vector.shape_cast %985 : vector<1x128xf32> to vector<1x128xf32>
    %991 = vector.broadcast %990 : vector<1x128xf32> to vector<8x128xf32>
    %992 = arith.select %987, %989, %991 : vector<8x128xi1>, vector<8x128xf32>
    %993 = arith.mulf %992, %983 : vector<8x128xf32>
    %994 = arith.mulf %993, %974 : vector<8x128xf32>
    %c0_280 = arith.constant 0 : index
    %c896_281 = arith.constant 896 : index
    %995 = vector.load %arg5[%c0_280, %c896_281] : memref<8x1024xf32, #tpu.memory_space<vmem>>, vector<8x128xf32>
    tpu.vector_store %arg5[%c0_280, %c896_281], %994 {strides = array<i32>} : memref<8x1024xf32, #tpu.memory_space<vmem>>, vector<8x128xf32>,
    %c64_i32_282 = arith.constant 64 : i32
    %996 = vector.broadcast %c64_i32_282 : i32 to vector<1x128xi32>
    %997 = arith.muli %963, %996 : vector<1x128xi32>
    %c8_i32_283 = arith.constant 8 : i32
    %998 = vector.broadcast %c8_i32_283 : i32 to vector<1x128xi32>
    %999 = arith.muli %946, %998 : vector<1x128xi32>
    %1000 = arith.addi %997, %999 : vector<1x128xi32>
    %1001 = arith.addi %1000, %929 : vector<1x128xi32>
    %1002 = vector.broadcast %1001 : vector<1x128xi32> to vector<8x128xi32>
    %1003 = vector.broadcast %20 : vector<8x1xi32> to vector<8x128xi32>
    %1004 = arith.addi %1002, %1003 : vector<8x128xi32>
    %c7_i32_284 = arith.constant 7 : i32
    %1005 = vector.broadcast %c7_i32_284 : i32 to vector<8x128xi32>
    %1006 = arith.shrsi %1004, %1005 : vector<8x128xi32>
    %c127_i32_285 = arith.constant 127 : i32
    %1007 = vector.broadcast %c127_i32_285 : i32 to vector<8x128xi32>
    %1008 = arith.andi %1004, %1007 : vector<8x128xi32>
    %1009 = vector.shape_cast %1008 : vector<8x128xi32> to vector<8x128x1xi32>
    %1010 = vector.shape_cast %1009 : vector<8x128x1xi32> to vector<8x128xi32>
    %1011 = tpu.dynamic_gather %27[%1010] in [1] : vector<8x128xi32>, vector<8x128xi32> -> vector<8x128xi32>
    %1012 = vector.shape_cast %1008 : vector<8x128xi32> to vector<8x128x1xi32>
    %1013 = vector.shape_cast %1012 : vector<8x128x1xi32> to vector<8x128xi32>
    %1014 = tpu.dynamic_gather %28[%1013] in [1] : vector<8x128xi32>, vector<8x128xi32> -> vector<8x128xi32>
    %c1_i32_286 = arith.constant 1 : i32
    %1015 = vector.broadcast %c1_i32_286 : i32 to vector<8x128xi32>
    %1016 = arith.cmpi eq, %1006, %1015 : vector<8x128xi32>
    %1017 = arith.select %1016, %1014, %1011 : vector<8x128xi1>, vector<8x128xi32>
    %1018 = vector.shape_cast %1008 : vector<8x128xi32> to vector<8x128x1xi32>
    %1019 = vector.shape_cast %1018 : vector<8x128x1xi32> to vector<8x128xi32>
    %1020 = tpu.dynamic_gather %29[%1019] in [1] : vector<8x128xi32>, vector<8x128xi32> -> vector<8x128xi32>
    %c2_i32_287 = arith.constant 2 : i32
    %1021 = vector.broadcast %c2_i32_287 : i32 to vector<8x128xi32>
    %1022 = arith.cmpi eq, %1006, %1021 : vector<8x128xi32>
    %1023 = arith.select %1022, %1020, %1017 : vector<8x128xi1>, vector<8x128xi32>
    %1024 = vector.shape_cast %1008 : vector<8x128xi32> to vector<8x128x1xi32>
    %1025 = vector.shape_cast %1024 : vector<8x128x1xi32> to vector<8x128xi32>
    %1026 = tpu.dynamic_gather %30[%1025] in [1] : vector<8x128xi32>, vector<8x128xi32> -> vector<8x128xi32>
    %c3_i32_288 = arith.constant 3 : i32
    %1027 = vector.broadcast %c3_i32_288 : i32 to vector<8x128xi32>
    %1028 = arith.cmpi eq, %1006, %1027 : vector<8x128xi32>
    %1029 = arith.select %1028, %1026, %1023 : vector<8x128xi1>, vector<8x128xi32>
    %c0_289 = arith.constant 0 : index
    %c896_290 = arith.constant 896 : index
    %1030 = vector.load %arg4[%c0_289, %c896_290] : memref<8x1024xi32, #tpu.memory_space<vmem>>, vector<8x128xi32>
    tpu.vector_store %arg4[%c0_289, %c896_290], %1029 {strides = array<i32>} : memref<8x1024xi32, #tpu.memory_space<vmem>>, vector<8x128xi32>,
    return
  }
  func.func @transform_0(%arg0: i32) -> (i32, i32) {
    %c0_i32 = arith.constant 0 : i32
    %c0_i32_0 = arith.constant 0 : i32
    return %c0_i32, %arg0 : i32, i32
  }
  func.func @transform_1(%arg0: i32) -> (i32, i32) {
    %c0_i32 = arith.constant 0 : i32
    %c0_i32_0 = arith.constant 0 : i32
    %c0_i32_1 = arith.constant 0 : i32
    return %c0_i32, %c0_i32_0 : i32, i32
  }
  func.func @transform_2(%arg0: i32) -> (i32, i32) {
    %c0_i32 = arith.constant 0 : i32
    %c0_i32_0 = arith.constant 0 : i32
    %c0_i32_1 = arith.constant 0 : i32
    return %c0_i32, %c0_i32_0 : i32, i32
  }
  func.func @transform_3(%arg0: i32) -> (i32, i32) {
    %c0_i32 = arith.constant 0 : i32
    %c0_i32_0 = arith.constant 0 : i32
    return %c0_i32, %arg0 : i32, i32
  }
  func.func @transform_4(%arg0: i32) -> (i32, i32) {
    %c0_i32 = arith.constant 0 : i32
    %c0_i32_0 = arith.constant 0 : i32
    return %c0_i32, %arg0 : i32, i32
  }
}

</mosaic_0001>

<llo_original>
// kernel: tpu_custom_call.1
$region0: #{tpu_custom_call.1}
  #allocation0 [shape = 'u32[]', space=smem, size = 0x4, offset = 0x4, fixed_abs, tag = 'smem constant byte address 0x4 - core index']
  #allocation1 [shape = 'u32[144,128]{1,0:T(1,128)}', space=vmem, size = 0x12000, scoped, tag = 'internal scratch']
  %s0 = inlined_call_operand.hbm [shape: f32[3,1024], index: 0, kind: input, shape index: {}]
  %s1 = inlined_call_operand.vmem [shape: f32[3,2], index: 1, kind: input, shape index: {}]
  %s2 = inlined_call_operand.hbm [shape: s32[8,512], index: 2, kind: input, shape index: {}]
  %s3 = inlined_call_operand.hbm [shape: s32[8,1024], index: 3, kind: output, shape index: {0}]
  %s4 = inlined_call_operand.hbm [shape: f32[8,1024], index: 4, kind: output, shape index: {1}]
  %5 = xla_tuple %s3, %s4
  %s6 = sld [smem:[#allocation0]]
  $region38: #{tpu_custom_call.1} parent=0
    _
  %s8 = ssub.s32 1, %s6
  %s9 = scalar_select 0, %s8, %s6
  $region1: #{tpu_custom_call.1} parent=0
    #allocation2 [shape = 'u8[16384]{0}', space=vmem, size = 0x4000, scoped, tag = 'input window, operand 0, single buffered']
    #allocation3 [shape = 's32[1]{0}', space=sflag, size = 0x4, scoped, tag = 'scoped memory for tpu_custom_call.1']
    #allocation4 [shape = 's32[1]{0}', space=sflag, size = 0x4, scoped, tag = 'scoped memory for tpu_custom_call.1']
    #allocation5 [shape = 'u8[16384]{0}', space=vmem, size = 0x4000, scoped, tag = 'input window, operand 2, single buffered']
    #allocation6 [shape = 's32[1]{0}', space=sflag, size = 0x4, scoped, tag = 'scoped memory for tpu_custom_call.1']
    #allocation7 [shape = 'u8[32768]{0}', space=vmem, size = 0x8000, scoped, tag = 'output window, operand 0, single buffered']
    #allocation8 [shape = 'u8[32768]{0}', space=vmem, size = 0x8000, scoped, tag = 'output window, operand 1, single buffered']
    #allocation9 [shape = 's32[1]{0}', space=sflag, size = 0x4, scoped, tag = 'scoped memory for tpu_custom_call.1']
    %10 = vsyncpa [#allocation3], 0
    %11 = vsyncpa [#allocation6], 0
    %12 = vsyncpa [#allocation4], 0
    %13 = vsyncpa [#allocation9], 0
    // Predicated region
    $region2: #{tpu_custom_call.1} parent=1 // pred_check
      _
    $region3: #{tpu_custom_call.1} parent=1 // pred_check_branch
      %15 = sbr.rel (0) target = $region5
    $region4: #{tpu_custom_call.1} parent=1 // pred_region
      %s17 = ssub.s32 512, 512
      %18 = vsyncadd [#allocation3], %s17
      %s20 = sshll.u32 [#allocation2], 4
      %s21 = int_to_ptr.vmem [resolvable:$true] %s20
      %23 = dma.hbm_to_vmem [thread:$0]  %s0, 512, %s21, [#allocation3]
    $region5: #{tpu_custom_call.1} parent=1 // pred_fallthru
      _
    // Predicated region
    $region6: #{tpu_custom_call.1} parent=1 // pred_check
      _
    $region7: #{tpu_custom_call.1} parent=1 // pred_check_branch
      %25 = sbr.rel (0) target = $region9
    $region8: #{tpu_custom_call.1} parent=1 // pred_region
      _
    $region9: #{tpu_custom_call.1} parent=1 // pred_fallthru
      _
    // Predicated region
    $region10: #{tpu_custom_call.1} parent=1 // pred_check
      _
    $region11: #{tpu_custom_call.1} parent=1 // pred_check_branch
      %27 = sbr.rel (0) target = $region13
    $region12: #{tpu_custom_call.1} parent=1 // pred_region
      %s29 = ssub.s32 512, 512
      %30 = vsyncadd [#allocation6], %s29
      %s32 = sshll.u32 [#allocation5], 4
      %s33 = int_to_ptr.vmem [resolvable:$true] %s32
      %35 = dma.hbm_to_vmem [thread:$0]  %s2, 512, %s33, [#allocation6]
    $region13: #{tpu_custom_call.1} parent=1 // pred_fallthru
      _
    // Predicated region
    $region14: #{tpu_custom_call.1} parent=1 // pred_check
      _
    $region15: #{tpu_custom_call.1} parent=1 // pred_check_branch
      %37 = sbr.rel (0) target = $region17
    $region16: #{tpu_custom_call.1} parent=1 // pred_region
      %38 = dma.done [#allocation3], 512
    $region17: #{tpu_custom_call.1} parent=1 // pred_fallthru
      _
    // Predicated region
    $region18: #{tpu_custom_call.1} parent=1 // pred_check
      _
    $region19: #{tpu_custom_call.1} parent=1 // pred_check_branch
      %40 = sbr.rel (0) target = $region21
    $region20: #{tpu_custom_call.1} parent=1 // pred_region
      %41 = dma.done [#allocation6], 512
    $region21: #{tpu_custom_call.1} parent=1 // pred_fallthru
      _
    %v42 = vld [vmem:[%s1] sm:$0x7]
    %44 = vrot.lane.b32.xlu0 %v42, 1
    %v45 = vpop.permute.xlu0 %44
    %v47 = vsub.f32 %v42, %v45
    %v48 = vlaneseq
    %v49 = vshrl.u32 %v48, 7
    %v50 = vand.u32 %v49, 1
    %v51 = vshra.s32 %v49, 1
    %v52 = vand.u32 %v51, 1
    %v53 = vshra.s32 %v49, 2
    %v54 = vand.u32 %v53, 1
    %v55 = vmul.u32 %v54, 64
    %v56 = vmul.u32 %v52, 8
    %v57 = vadd.s32 %v55, %v56
    %v58 = vadd.s32 %v57, %v50
    %vm59 = vcmp.eq.s32.totalorder %v50, 1
    %vm60 = vcmp.eq.s32.totalorder %v52, 1
    %vm61 = vcmp.eq.s32.totalorder %v54, 1
    %v62 = vld [vmem:[#allocation5] sm:$0xff]
    %v63 = vld [vmem:[#allocation5 + $0x8] sm:$0xff]
    %v64 = vld [vmem:[#allocation5 + $0x10] sm:$0xff]
    %v65 = vld [vmem:[#allocation5 + $0x18] sm:$0xff]
    %v66 = vld [vmem:[#allocation2] sm:$0x7]
    %67 = vset.pattern.permute.xlu0 0
    %68 = vperm.xlu0 %67, %v42
    %v69 = vpop.permute.xlu0 %68
    %v71 = vsub.f32 %v66, %v69
    %73 = vset.pattern.permute.xlu0 1
    %74 = vperm.xlu0 %73, %v47
    %v75 = vpop.permute.xlu0 %74
    %v77 = vrcp.pop %v75
    %v78 = vmul.f32 %v71, %v77
    %v79 = vmul.f32 %v78, 2.0
    %v80 = vsub.f32 %v79, 1.0
    %v81 = vadd.f32 %v80, 1.0
    %v82 = vmul.f32 %v81, 0.5
    %v83 = vmul.f32 %v82, 7.0
    %v84 = vmax.f32 %v83, 0.0
    %v85 = vmin.f32 %v84, 7.0
    %v86 = vfloor.f32 %v85
    %v87 = vcvt.f32.s32.to.zero.pseudo %v86
    %vm88 = vcmp.lt.s32.totalorder %v87, 6
    %v89 = vsel %vm88, %v87, 6
    %v90 = vcvt.s32.f32 %v89
    %v91 = vsub.f32 %v85, %v90
    %v92 = vsub.f32 1.0, %v91
    %v93 = vsel %vm59, 1, 0
    %vm94 = vcmp.eq.s32.totalorder %v93, 1
    %v95 = vlaneseq
    %v96 = vshrl.u32 %v95, 7
    %v97 = vsub.s32 0, %v96
    %v98 = vrot.slane %v91, %v97
    %v99 = vlaneseq
    %v100 = vshrl.u32 %v99, 7
    %v101 = vsub.s32 0, %v100
    %v102 = vrot.slane %v92, %v101
    %v103 = vsel %vm94, %v98, %v102
    %v104 = vsel %vm60, 1, 0
    %vm105 = vcmp.eq.s32.totalorder %v104, 1
    %v106 = vlaneseq
    %v107 = vshrl.u32 %v106, 7
    %v108 = vsub.s32 1, %v107
    %v109 = vrot.slane %v91, %v108
    %v110 = vlaneseq
    %v111 = vshrl.u32 %v110, 7
    %v112 = vsub.s32 1, %v111
    %v113 = vrot.slane %v92, %v112
    %v114 = vsel %vm105, %v109, %v113
    %v115 = vsel %vm61, 1, 0
    %vm116 = vcmp.eq.s32.totalorder %v115, 1
    %v117 = vlaneseq
    %v118 = vshrl.u32 %v117, 7
    %v119 = vsub.s32 2, %v118
    %v120 = vrot.slane %v91, %v119
    %v121 = vlaneseq
    %v122 = vshrl.u32 %v121, 7
    %v123 = vsub.s32 2, %v122
    %v124 = vrot.slane %v92, %v123
    %v125 = vsel %vm116, %v120, %v124
    %v126 = vmul.f32 %v125, %v114
    %v127 = vmul.f32 %v126, %v103
    %128 = vst [vmem:[#allocation8] sm:$0xff] %v127
    %v129 = vmul.u32 %v89, 64
    %v130 = vmul.u32 %v89, 8
    %v131 = vrot.slane %v130, 7
    %v132 = vadd.s32 %v129, %v131
    %v133 = vrot.slane %v89, 6
    %v134 = vadd.s32 %v132, %v133
    %v135 = vlaneseq
    %v136 = vshrl.u32 %v135, 7
    %v137 = vsub.s32 2, %v136
    %v138 = vrot.slane %v134, %v137
    %v139 = vadd.s32 %v138, %v58
    %v140 = vshra.s32 %v139, 7
    %v141 = vand.u32 %v139, 127
    %142 = vset.pattern.permute.xlu0 %v141
    %143 = vperm.xlu0 %142, %v62
    %v144 = vpop.permute.xlu0 %143
    %145 = vset.pattern.permute.xlu0 %v141
    %146 = vperm.xlu0 %145, %v63
    %v147 = vpop.permute.xlu0 %146
    %vm148 = vcmp.eq.s32.totalorder %v140, 1
    %v149 = vsel %vm148, %v147, %v144
    %150 = vset.pattern.permute.xlu0 %v141
    %151 = vperm.xlu0 %150, %v64
    %v152 = vpop.permute.xlu0 %151
    %vm153 = vcmp.eq.s32.totalorder %v140, 2
    %v154 = vsel %vm153, %v152, %v149
    %155 = vset.pattern.permute.xlu0 %v141
    %156 = vperm.xlu0 %155, %v65
    %v157 = vpop.permute.xlu0 %156
    %vm158 = vcmp.eq.s32.totalorder %v140, 3
    %v159 = vsel %vm158, %v157, %v154
    %160 = vst [vmem:[#allocation7] sm:$0xff] %v159
    %v161 = vld [vmem:[#allocation2 + $0x4] sm:$0x7]
    %v162 = vsub.f32 %v161, %v69
    %v163 = vmul.f32 %v162, %v77
    %v164 = vmul.f32 %v163, 2.0
    %v165 = vsub.f32 %v164, 1.0
    %v166 = vadd.f32 %v165, 1.0
    %v167 = vmul.f32 %v166, 0.5
    %v168 = vmul.f32 %v167, 7.0
    %v169 = vmax.f32 %v168, 0.0
    %v170 = vmin.f32 %v169, 7.0
    %v171 = vfloor.f32 %v170
    %v172 = vcvt.f32.s32.to.zero.pseudo %v171
    %vm173 = vcmp.lt.s32.totalorder %v172, 6
    %v174 = vsel %vm173, %v172, 6
    %v175 = vcvt.s32.f32 %v174
    %v176 = vsub.f32 %v170, %v175
    %v177 = vsub.f32 1.0, %v176
    %v178 = vlaneseq
    %v179 = vshrl.u32 %v178, 7
    %v180 = vsub.s32 0, %v179
    %v181 = vrot.slane %v176, %v180
    %v182 = vlaneseq
    %v183 = vshrl.u32 %v182, 7
    %v184 = vsub.s32 0, %v183
    %v185 = vrot.slane %v177, %v184
    %v186 = vsel %vm94, %v181, %v185
    %v187 = vlaneseq
    %v188 = vshrl.u32 %v187, 7
    %v189 = vsub.s32 1, %v188
    %v190 = vrot.slane %v176, %v189
    %v191 = vlaneseq
    %v192 = vshrl.u32 %v191, 7
    %v193 = vsub.s32 1, %v192
    %v194 = vrot.slane %v177, %v193
    %v195 = vsel %vm105, %v190, %v194
    %v196 = vlaneseq
    %v197 = vshrl.u32 %v196, 7
    %v198 = vsub.s32 2, %v197
    %v199 = vrot.slane %v176, %v198
    %v200 = vlaneseq
    %v201 = vshrl.u32 %v200, 7
    %v202 = vsub.s32 2, %v201
    %v203 = vrot.slane %v177, %v202
    %v204 = vsel %vm116, %v199, %v203
    %v205 = vmul.f32 %v204, %v195
    %v206 = vmul.f32 %v205, %v186
    %207 = vst [vmem:[#allocation8 + $0x8] sm:$0xff] %v206
    %v208 = vmul.u32 %v174, 64
    %v209 = vmul.u32 %v174, 8
    %v210 = vrot.slane %v209, 7
    %v211 = vadd.s32 %v208, %v210
    %v212 = vrot.slane %v174, 6
    %v213 = vadd.s32 %v211, %v212
    %v214 = vlaneseq
    %v215 = vshrl.u32 %v214, 7
    %v216 = vsub.s32 2, %v215
    %v217 = vrot.slane %v213, %v216
    %v218 = vadd.s32 %v217, %v58
    %v219 = vshra.s32 %v218, 7
    %v220 = vand.u32 %v218, 127
    %221 = vset.pattern.permute.xlu0 %v220
    %222 = vperm.xlu0 %221, %v62
    %v223 = vpop.permute.xlu0 %222
    %224 = vset.pattern.permute.xlu0 %v220
    %225 = vperm.xlu0 %224, %v63
    %v226 = vpop.permute.xlu0 %225
    %vm227 = vcmp.eq.s32.totalorder %v219, 1
    %v228 = vsel %vm227, %v226, %v223
    %229 = vset.pattern.permute.xlu0 %v220
    %230 = vperm.xlu0 %229, %v64
    %v231 = vpop.permute.xlu0 %230
    %vm232 = vcmp.eq.s32.totalorder %v219, 2
    %v233 = vsel %vm232, %v231, %v228
    %234 = vset.pattern.permute.xlu0 %v220
    %235 = vperm.xlu0 %234, %v65
    %v236 = vpop.permute.xlu0 %235
    %vm237 = vcmp.eq.s32.totalorder %v219, 3
    %v238 = vsel %vm237, %v236, %v233
    %239 = vst [vmem:[#allocation7 + $0x8] sm:$0xff] %v238
    %v240 = vld [vmem:[#allocation2 + $0x8] sm:$0x7]
    %v241 = vsub.f32 %v240, %v69
    %v242 = vmul.f32 %v241, %v77
    %v243 = vmul.f32 %v242, 2.0
    %v244 = vsub.f32 %v243, 1.0
    %v245 = vadd.f32 %v244, 1.0
    %v246 = vmul.f32 %v245, 0.5
    %v247 = vmul.f32 %v246, 7.0
    %v248 = vmax.f32 %v247, 0.0
    %v249 = vmin.f32 %v248, 7.0
    %v250 = vfloor.f32 %v249
    %v251 = vcvt.f32.s32.to.zero.pseudo %v250
    %vm252 = vcmp.lt.s32.totalorder %v251, 6
    %v253 = vsel %vm252, %v251, 6
    %v254 = vcvt.s32.f32 %v253
    %v255 = vsub.f32 %v249, %v254
    %v256 = vsub.f32 1.0, %v255
    %v257 = vlaneseq
    %v258 = vshrl.u32 %v257, 7
    %v259 = vsub.s32 0, %v258
    %v260 = vrot.slane %v255, %v259
    %v261 = vlaneseq
    %v262 = vshrl.u32 %v261, 7
    %v263 = vsub.s32 0, %v262
    %v264 = vrot.slane %v256, %v263
    %v265 = vsel %vm94, %v260, %v264
    %v266 = vlaneseq
    %v267 = vshrl.u32 %v266, 7
    %v268 = vsub.s32 1, %v267
    %v269 = vrot.slane %v255, %v268
    %v270 = vlaneseq
    %v271 = vshrl.u32 %v270, 7
    %v272 = vsub.s32 1, %v271
    %v273 = vrot.slane %v256, %v272
    %v274 = vsel %vm105, %v269, %v273
    %v275 = vlaneseq
    %v276 = vshrl.u32 %v275, 7
    %v277 = vsub.s32 2, %v276
    %v278 = vrot.slane %v255, %v277
    %v279 = vlaneseq
    %v280 = vshrl.u32 %v279, 7
    %v281 = vsub.s32 2, %v280
    %v282 = vrot.slane %v256, %v281
    %v283 = vsel %vm116, %v278, %v282
    %v284 = vmul.f32 %v283, %v274
    %v285 = vmul.f32 %v284, %v265
    %286 = vst [vmem:[#allocation8 + $0x10] sm:$0xff] %v285
    %v287 = vmul.u32 %v253, 64
    %v288 = vmul.u32 %v253, 8
    %v289 = vrot.slane %v288, 7
    %v290 = vadd.s32 %v287, %v289
    %v291 = vrot.slane %v253, 6
    %v292 = vadd.s32 %v290, %v291
    %v293 = vlaneseq
    %v294 = vshrl.u32 %v293, 7
    %v295 = vsub.s32 2, %v294
    %v296 = vrot.slane %v292, %v295
    %v297 = vadd.s32 %v296, %v58
    %v298 = vshra.s32 %v297, 7
    %v299 = vand.u32 %v297, 127
    %300 = vset.pattern.permute.xlu0 %v299
    %301 = vperm.xlu0 %300, %v62
    %v302 = vpop.permute.xlu0 %301
    %303 = vset.pattern.permute.xlu0 %v299
    %304 = vperm.xlu0 %303, %v63
    %v305 = vpop.permute.xlu0 %304
    %vm306 = vcmp.eq.s32.totalorder %v298, 1
    %v307 = vsel %vm306, %v305, %v302
    %308 = vset.pattern.permute.xlu0 %v299
    %309 = vperm.xlu0 %308, %v64
    %v310 = vpop.permute.xlu0 %309
    %vm311 = vcmp.eq.s32.totalorder %v298, 2
    %v312 = vsel %vm311, %v310, %v307
    %313 = vset.pattern.permute.xlu0 %v299
    %314 = vperm.xlu0 %313, %v65
    %v315 = vpop.permute.xlu0 %314
    %vm316 = vcmp.eq.s32.totalorder %v298, 3
    %v317 = vsel %vm316, %v315, %v312
    %318 = vst [vmem:[#allocation7 + $0x10] sm:$0xff] %v317
    %v319 = vld [vmem:[#allocation2 + $0xc] sm:$0x7]
    %v320 = vsub.f32 %v319, %v69
    %v321 = vmul.f32 %v320, %v77
    %v322 = vmul.f32 %v321, 2.0
    %v323 = vsub.f32 %v322, 1.0
    %v324 = vadd.f32 %v323, 1.0
    %v325 = vmul.f32 %v324, 0.5
    %v326 = vmul.f32 %v325, 7.0
    %v327 = vmax.f32 %v326, 0.0
    %v328 = vmin.f32 %v327, 7.0
    %v329 = vfloor.f32 %v328
    %v330 = vcvt.f32.s32.to.zero.pseudo %v329
    %vm331 = vcmp.lt.s32.totalorder %v330, 6
    %v332 = vsel %vm331, %v330, 6
    %v333 = vcvt.s32.f32 %v332
    %v334 = vsub.f32 %v328, %v333
    %v335 = vsub.f32 1.0, %v334
    %v336 = vlaneseq
    %v337 = vshrl.u32 %v336, 7
    %v338 = vsub.s32 0, %v337
    %v339 = vrot.slane %v334, %v338
    %v340 = vlaneseq
    %v341 = vshrl.u32 %v340, 7
    %v342 = vsub.s32 0, %v341
    %v343 = vrot.slane %v335, %v342
    %v344 = vsel %vm94, %v339, %v343
    %v345 = vlaneseq
    %v346 = vshrl.u32 %v345, 7
    %v347 = vsub.s32 1, %v346
    %v348 = vrot.slane %v334, %v347
    %v349 = vlaneseq
    %v350 = vshrl.u32 %v349, 7
    %v351 = vsub.s32 1, %v350
    %v352 = vrot.slane %v335, %v351
    %v353 = vsel %vm105, %v348, %v352
    %v354 = vlaneseq
    %v355 = vshrl.u32 %v354, 7
    %v356 = vsub.s32 2, %v355
    %v357 = vrot.slane %v334, %v356
    %v358 = vlaneseq
    %v359 = vshrl.u32 %v358, 7
    %v360 = vsub.s32 2, %v359
    %v361 = vrot.slane %v335, %v360
    %v362 = vsel %vm116, %v357, %v361
    %v363 = vmul.f32 %v362, %v353
    %v364 = vmul.f32 %v363, %v344
    %365 = vst [vmem:[#allocation8 + $0x18] sm:$0xff] %v364
    %v366 = vmul.u32 %v332, 64
    %v367 = vmul.u32 %v332, 8
    %v368 = vrot.slane %v367, 7
    %v369 = vadd.s32 %v366, %v368
    %v370 = vrot.slane %v332, 6
    %v371 = vadd.s32 %v369, %v370
    %v372 = vlaneseq
    %v373 = vshrl.u32 %v372, 7
    %v374 = vsub.s32 2, %v373
    %v375 = vrot.slane %v371, %v374
    %v376 = vadd.s32 %v375, %v58
    %v377 = vshra.s32 %v376, 7
    %v378 = vand.u32 %v376, 127
    %379 = vset.pattern.permute.xlu0 %v378
    %380 = vperm.xlu0 %379, %v62
    %v381 = vpop.permute.xlu0 %380
    %382 = vset.pattern.permute.xlu0 %v378
    %383 = vperm.xlu0 %382, %v63
    %v384 = vpop.permute.xlu0 %383
    %vm385 = vcmp.eq.s32.totalorder %v377, 1
    %v386 = vsel %vm385, %v384, %v381
    %387 = vset.pattern.permute.xlu0 %v378
    %388 = vperm.xlu0 %387, %v64
    %v389 = vpop.permute.xlu0 %388
    %vm390 = vcmp.eq.s32.totalorder %v377, 2
    %v391 = vsel %vm390, %v389, %v386
    %392 = vset.pattern.permute.xlu0 %v378
    %393 = vperm.xlu0 %392, %v65
    %v394 = vpop.permute.xlu0 %393
    %vm395 = vcmp.eq.s32.totalorder %v377, 3
    %v396 = vsel %vm395, %v394, %v391
    %397 = vst [vmem:[#allocation7 + $0x18] sm:$0xff] %v396
    %v398 = vld [vmem:[#allocation2 + $0x10] sm:$0x7]
    %v399 = vsub.f32 %v398, %v69
    %v400 = vmul.f32 %v399, %v77
    %v401 = vmul.f32 %v400, 2.0
    %v402 = vsub.f32 %v401, 1.0
    %v403 = vadd.f32 %v402, 1.0
    %v404 = vmul.f32 %v403, 0.5
    %v405 = vmul.f32 %v404, 7.0
    %v406 = vmax.f32 %v405, 0.0
    %v407 = vmin.f32 %v406, 7.0
    %v408 = vfloor.f32 %v407
    %v409 = vcvt.f32.s32.to.zero.pseudo %v408
    %vm410 = vcmp.lt.s32.totalorder %v409, 6
    %v411 = vsel %vm410, %v409, 6
    %v412 = vcvt.s32.f32 %v411
    %v413 = vsub.f32 %v407, %v412
    %v414 = vsub.f32 1.0, %v413
    %v415 = vlaneseq
    %v416 = vshrl.u32 %v415, 7
    %v417 = vsub.s32 0, %v416
    %v418 = vrot.slane %v413, %v417
    %v419 = vlaneseq
    %v420 = vshrl.u32 %v419, 7
    %v421 = vsub.s32 0, %v420
    %v422 = vrot.slane %v414, %v421
    %v423 = vsel %vm94, %v418, %v422
    %v424 = vlaneseq
    %v425 = vshrl.u32 %v424, 7
    %v426 = vsub.s32 1, %v425
    %v427 = vrot.slane %v413, %v426
    %v428 = vlaneseq
    %v429 = vshrl.u32 %v428, 7
    %v430 = vsub.s32 1, %v429
    %v431 = vrot.slane %v414, %v430
    %v432 = vsel %vm105, %v427, %v431
    %v433 = vlaneseq
    %v434 = vshrl.u32 %v433, 7
    %v435 = vsub.s32 2, %v434
    %v436 = vrot.slane %v413, %v435
    %v437 = vlaneseq
    %v438 = vshrl.u32 %v437, 7
    %v439 = vsub.s32 2, %v438
    %v440 = vrot.slane %v414, %v439
    %v441 = vsel %vm116, %v436, %v440
    %v442 = vmul.f32 %v441, %v432
    %v443 = vmul.f32 %v442, %v423
    %444 = vst [vmem:[#allocation8 + $0x20] sm:$0xff] %v443
    %v445 = vmul.u32 %v411, 64
    %v446 = vmul.u32 %v411, 8
    %v447 = vrot.slane %v446, 7
    %v448 = vadd.s32 %v445, %v447
    %v449 = vrot.slane %v411, 6
    %v450 = vadd.s32 %v448, %v449
    %v451 = vlaneseq
    %v452 = vshrl.u32 %v451, 7
    %v453 = vsub.s32 2, %v452
    %v454 = vrot.slane %v450, %v453
    %v455 = vadd.s32 %v454, %v58
    %v456 = vshra.s32 %v455, 7
    %v457 = vand.u32 %v455, 127
    %458 = vset.pattern.permute.xlu0 %v457
    %459 = vperm.xlu0 %458, %v62
    %v460 = vpop.permute.xlu0 %459
    %461 = vset.pattern.permute.xlu0 %v457
    %462 = vperm.xlu0 %461, %v63
    %v463 = vpop.permute.xlu0 %462
    %vm464 = vcmp.eq.s32.totalorder %v456, 1
    %v465 = vsel %vm464, %v463, %v460
    %466 = vset.pattern.permute.xlu0 %v457
    %467 = vperm.xlu0 %466, %v64
    %v468 = vpop.permute.xlu0 %467
    %vm469 = vcmp.eq.s32.totalorder %v456, 2
    %v470 = vsel %vm469, %v468, %v465
    %471 = vset.pattern.permute.xlu0 %v457
    %472 = vperm.xlu0 %471, %v65
    %v473 = vpop.permute.xlu0 %472
    %vm474 = vcmp.eq.s32.totalorder %v456, 3
    %v475 = vsel %vm474, %v473, %v470
    %476 = vst [vmem:[#allocation7 + $0x20] sm:$0xff] %v475
    %v477 = vld [vmem:[#allocation2 + $0x14] sm:$0x7]
    %v478 = vsub.f32 %v477, %v69
    %v479 = vmul.f32 %v478, %v77
    %v480 = vmul.f32 %v479, 2.0
    %v481 = vsub.f32 %v480, 1.0
    %v482 = vadd.f32 %v481, 1.0
    %v483 = vmul.f32 %v482, 0.5
    %v484 = vmul.f32 %v483, 7.0
    %v485 = vmax.f32 %v484, 0.0
    %v486 = vmin.f32 %v485, 7.0
    %v487 = vfloor.f32 %v486
    %v488 = vcvt.f32.s32.to.zero.pseudo %v487
    %vm489 = vcmp.lt.s32.totalorder %v488, 6
    %v490 = vsel %vm489, %v488, 6
    %v491 = vcvt.s32.f32 %v490
    %v492 = vsub.f32 %v486, %v491
    %v493 = vsub.f32 1.0, %v492
    %v494 = vlaneseq
    %v495 = vshrl.u32 %v494, 7
    %v496 = vsub.s32 0, %v495
    %v497 = vrot.slane %v492, %v496
    %v498 = vlaneseq
    %v499 = vshrl.u32 %v498, 7
    %v500 = vsub.s32 0, %v499
    %v501 = vrot.slane %v493, %v500
    %v502 = vsel %vm94, %v497, %v501
    %v503 = vlaneseq
    %v504 = vshrl.u32 %v503, 7
    %v505 = vsub.s32 1, %v504
    %v506 = vrot.slane %v492, %v505
    %v507 = vlaneseq
    %v508 = vshrl.u32 %v507, 7
    %v509 = vsub.s32 1, %v508
    %v510 = vrot.slane %v493, %v509
    %v511 = vsel %vm105, %v506, %v510
    %v512 = vlaneseq
    %v513 = vshrl.u32 %v512, 7
    %v514 = vsub.s32 2, %v513
    %v515 = vrot.slane %v492, %v514
    %v516 = vlaneseq
    %v517 = vshrl.u32 %v516, 7
    %v518 = vsub.s32 2, %v517
    %v519 = vrot.slane %v493, %v518
    %v520 = vsel %vm116, %v515, %v519
    %v521 = vmul.f32 %v520, %v511
    %v522 = vmul.f32 %v521, %v502
    %523 = vst [vmem:[#allocation8 + $0x28] sm:$0xff] %v522
    %v524 = vmul.u32 %v490, 64
    %v525 = vmul.u32 %v490, 8
    %v526 = vrot.slane %v525, 7
    %v527 = vadd.s32 %v524, %v526
    %v528 = vrot.slane %v490, 6
    %v529 = vadd.s32 %v527, %v528
    %v530 = vlaneseq
    %v531 = vshrl.u32 %v530, 7
    %v532 = vsub.s32 2, %v531
    %v533 = vrot.slane %v529, %v532
    %v534 = vadd.s32 %v533, %v58
    %v535 = vshra.s32 %v534, 7
    %v536 = vand.u32 %v534, 127
    %537 = vset.pattern.permute.xlu0 %v536
    %538 = vperm.xlu0 %537, %v62
    %v539 = vpop.permute.xlu0 %538
    %540 = vset.pattern.permute.xlu0 %v536
    %541 = vperm.xlu0 %540, %v63
    %v542 = vpop.permute.xlu0 %541
    %vm543 = vcmp.eq.s32.totalorder %v535, 1
    %v544 = vsel %vm543, %v542, %v539
    %545 = vset.pattern.permute.xlu0 %v536
    %546 = vperm.xlu0 %545, %v64
    %v547 = vpop.permute.xlu0 %546
    %vm548 = vcmp.eq.s32.totalorder %v535, 2
    %v549 = vsel %vm548, %v547, %v544
    %550 = vset.pattern.permute.xlu0 %v536
    %551 = vperm.xlu0 %550, %v65
    %v552 = vpop.permute.xlu0 %551
    %vm553 = vcmp.eq.s32.totalorder %v535, 3
    %v554 = vsel %vm553, %v552, %v549
    %555 = vst [vmem:[#allocation7 + $0x28] sm:$0xff] %v554
    %v556 = vld [vmem:[#allocation2 + $0x18] sm:$0x7]
    %v557 = vsub.f32 %v556, %v69
    %v558 = vmul.f32 %v557, %v77
    %v559 = vmul.f32 %v558, 2.0
    %v560 = vsub.f32 %v559, 1.0
    %v561 = vadd.f32 %v560, 1.0
    %v562 = vmul.f32 %v561, 0.5
    %v563 = vmul.f32 %v562, 7.0
    %v564 = vmax.f32 %v563, 0.0
    %v565 = vmin.f32 %v564, 7.0
    %v566 = vfloor.f32 %v565
    %v567 = vcvt.f32.s32.to.zero.pseudo %v566
    %vm568 = vcmp.lt.s32.totalorder %v567, 6
    %v569 = vsel %vm568, %v567, 6
    %v570 = vcvt.s32.f32 %v569
    %v571 = vsub.f32 %v565, %v570
    %v572 = vsub.f32 1.0, %v571
    %v573 = vlaneseq
    %v574 = vshrl.u32 %v573, 7
    %v575 = vsub.s32 0, %v574
    %v576 = vrot.slane %v571, %v575
    %v577 = vlaneseq
    %v578 = vshrl.u32 %v577, 7
    %v579 = vsub.s32 0, %v578
    %v580 = vrot.slane %v572, %v579
    %v581 = vsel %vm94, %v576, %v580
    %v582 = vlaneseq
    %v583 = vshrl.u32 %v582, 7
    %v584 = vsub.s32 1, %v583
    %v585 = vrot.slane %v571, %v584
    %v586 = vlaneseq
    %v587 = vshrl.u32 %v586, 7
    %v588 = vsub.s32 1, %v587
    %v589 = vrot.slane %v572, %v588
    %v590 = vsel %vm105, %v585, %v589
    %v591 = vlaneseq
    %v592 = vshrl.u32 %v591, 7
    %v593 = vsub.s32 2, %v592
    %v594 = vrot.slane %v571, %v593
    %v595 = vlaneseq
    %v596 = vshrl.u32 %v595, 7
    %v597 = vsub.s32 2, %v596
    %v598 = vrot.slane %v572, %v597
    %v599 = vsel %vm116, %v594, %v598
    %v600 = vmul.f32 %v599, %v590
    %v601 = vmul.f32 %v600, %v581
    %602 = vst [vmem:[#allocation8 + $0x30] sm:$0xff] %v601
    %v603 = vmul.u32 %v569, 64
    %v604 = vmul.u32 %v569, 8
    %v605 = vrot.slane %v604, 7
    %v606 = vadd.s32 %v603, %v605
    %v607 = vrot.slane %v569, 6
    %v608 = vadd.s32 %v606, %v607
    %v609 = vlaneseq
    %v610 = vshrl.u32 %v609, 7
    %v611 = vsub.s32 2, %v610
    %v612 = vrot.slane %v608, %v611
    %v613 = vadd.s32 %v612, %v58
    %v614 = vshra.s32 %v613, 7
    %v615 = vand.u32 %v613, 127
    %616 = vset.pattern.permute.xlu0 %v615
    %617 = vperm.xlu0 %616, %v62
    %v618 = vpop.permute.xlu0 %617
    %619 = vset.pattern.permute.xlu0 %v615
    %620 = vperm.xlu0 %619, %v63
    %v621 = vpop.permute.xlu0 %620
    %vm622 = vcmp.eq.s32.totalorder %v614, 1
    %v623 = vsel %vm622, %v621, %v618
    %624 = vset.pattern.permute.xlu0 %v615
    %625 = vperm.xlu0 %624, %v64
    %v626 = vpop.permute.xlu0 %625
    %vm627 = vcmp.eq.s32.totalorder %v614, 2
    %v628 = vsel %vm627, %v626, %v623
    %629 = vset.pattern.permute.xlu0 %v615
    %630 = vperm.xlu0 %629, %v65
    %v631 = vpop.permute.xlu0 %630
    %vm632 = vcmp.eq.s32.totalorder %v614, 3
    %v633 = vsel %vm632, %v631, %v628
    %634 = vst [vmem:[#allocation7 + $0x30] sm:$0xff] %v633
    %v635 = vld [vmem:[#allocation2 + $0x1c] sm:$0x7]
    %v636 = vsub.f32 %v635, %v69
    %v637 = vmul.f32 %v636, %v77
    %v638 = vmul.f32 %v637, 2.0
    %v639 = vsub.f32 %v638, 1.0
    %v640 = vadd.f32 %v639, 1.0
    %v641 = vmul.f32 %v640, 0.5
    %v642 = vmul.f32 %v641, 7.0
    %v643 = vmax.f32 %v642, 0.0
    %v644 = vmin.f32 %v643, 7.0
    %v645 = vfloor.f32 %v644
    %v646 = vcvt.f32.s32.to.zero.pseudo %v645
    %vm647 = vcmp.lt.s32.totalorder %v646, 6
    %v648 = vsel %vm647, %v646, 6
    %v649 = vcvt.s32.f32 %v648
    %v650 = vsub.f32 %v644, %v649
    %v651 = vsub.f32 1.0, %v650
    %v652 = vlaneseq
    %v653 = vshrl.u32 %v652, 7
    %v654 = vsub.s32 0, %v653
    %v655 = vrot.slane %v650, %v654
    %v656 = vlaneseq
    %v657 = vshrl.u32 %v656, 7
    %v658 = vsub.s32 0, %v657
    %v659 = vrot.slane %v651, %v658
    %v660 = vsel %vm94, %v655, %v659
    %v661 = vlaneseq
    %v662 = vshrl.u32 %v661, 7
    %v663 = vsub.s32 1, %v662
    %v664 = vrot.slane %v650, %v663
    %v665 = vlaneseq
    %v666 = vshrl.u32 %v665, 7
    %v667 = vsub.s32 1, %v666
    %v668 = vrot.slane %v651, %v667
    %v669 = vsel %vm105, %v664, %v668
    %v670 = vlaneseq
    %v671 = vshrl.u32 %v670, 7
    %v672 = vsub.s32 2, %v671
    %v673 = vrot.slane %v650, %v672
    %v674 = vlaneseq
    %v675 = vshrl.u32 %v674, 7
    %v676 = vsub.s32 2, %v675
    %v677 = vrot.slane %v651, %v676
    %v678 = vsel %vm116, %v673, %v677
    %v679 = vmul.f32 %v678, %v669
    %v680 = vmul.f32 %v679, %v660
    %681 = vst [vmem:[#allocation8 + $0x38] sm:$0xff] %v680
    %v682 = vmul.u32 %v648, 64
    %v683 = vmul.u32 %v648, 8
    %v684 = vrot.slane %v683, 7
    %v685 = vadd.s32 %v682, %v684
    %v686 = vrot.slane %v648, 6
    %v687 = vadd.s32 %v685, %v686
    %v688 = vlaneseq
    %v689 = vshrl.u32 %v688, 7
    %v690 = vsub.s32 2, %v689
    %v691 = vrot.slane %v687, %v690
    %v692 = vadd.s32 %v691, %v58
    %v693 = vshra.s32 %v692, 7
    %v694 = vand.u32 %v692, 127
    %695 = vset.pattern.permute.xlu0 %v694
    %696 = vperm.xlu0 %695, %v62
    %v697 = vpop.permute.xlu0 %696
    %698 = vset.pattern.permute.xlu0 %v694
    %699 = vperm.xlu0 %698, %v63
    %v700 = vpop.permute.xlu0 %699
    %vm701 = vcmp.eq.s32.totalorder %v693, 1
    %v702 = vsel %vm701, %v700, %v697
    %703 = vset.pattern.permute.xlu0 %v694
    %704 = vperm.xlu0 %703, %v64
    %v705 = vpop.permute.xlu0 %704
    %vm706 = vcmp.eq.s32.totalorder %v693, 2
    %v707 = vsel %vm706, %v705, %v702
    %708 = vset.pattern.permute.xlu0 %v694
    %709 = vperm.xlu0 %708, %v65
    %v710 = vpop.permute.xlu0 %709
    %vm711 = vcmp.eq.s32.totalorder %v693, 3
    %v712 = vsel %vm711, %v710, %v707
    %713 = vst [vmem:[#allocation7 + $0x38] sm:$0xff] %v712
    // Predicated region
    $region22: #{tpu_custom_call.1} parent=1 // pred_check
      _
    $region23: #{tpu_custom_call.1} parent=1 // pred_check_branch
      %715 = sbr.rel (0) target = $region25
    $region24: #{tpu_custom_call.1} parent=1 // pred_region
      %s717 = ssub.s32 1024, 1024
      %718 = vsyncadd [#allocation4], %s717
      %s720 = sshll.u32 [#allocation7], 4
      %s721 = int_to_ptr.vmem [resolvable:$true] %s720
      %723 = dma.vmem_to_hbm [thread:$0]  %s721, 1024, %s3, [#allocation4]
    $region25: #{tpu_custom_call.1} parent=1 // pred_fallthru
      _
    // Predicated region
    $region26: #{tpu_custom_call.1} parent=1 // pred_check
      _
    $region27: #{tpu_custom_call.1} parent=1 // pred_check_branch
      %725 = sbr.rel (0) target = $region29
    $region28: #{tpu_custom_call.1} parent=1 // pred_region
      %s727 = ssub.s32 1024, 1024
      %728 = vsyncadd [#allocation9], %s727
      %s730 = sshll.u32 [#allocation8], 4
      %s731 = int_to_ptr.vmem [resolvable:$true] %s730
      %733 = dma.vmem_to_hbm [thread:$0]  %s731, 1024, %s4, [#allocation9]
    $region29: #{tpu_custom_call.1} parent=1 // pred_fallthru
      _
    // Predicated region
    $region30: #{tpu_custom_call.1} parent=1 // pred_check
      _
    $region31: #{tpu_custom_call.1} parent=1 // pred_check_branch
      %735 = sbr.rel (0) target = $region33
    $region32: #{tpu_custom_call.1} parent=1 // pred_region
      %736 = dma.done [#allocation4], 1024
    $region33: #{tpu_custom_call.1} parent=1 // pred_fallthru
      _
    // Predicated region
    $region34: #{tpu_custom_call.1} parent=1 // pred_check
      _
    $region35: #{tpu_custom_call.1} parent=1 // pred_check_branch
      %738 = sbr.rel (0) target = $region37
    $region36: #{tpu_custom_call.1} parent=1 // pred_region
      %739 = dma.done [#allocation9], 1024
    $region37: #{tpu_custom_call.1} parent=1 // pred_fallthru
      _
    %740 = vsyncpa [#allocation3], 1
    %741 = vsyncpa [#allocation6], 1
    %742 = vsyncpa [#allocation4], 1
    %743 = vsyncpa [#allocation9], 1

</llo_original>
